<compile_context>
chip_gen: v5e
topology: v5e:2x2
jax: 0.10.0
libtpu: 0.0.40
codegen_flags: <defaults>
</compile_context>

<pallas_src>
import numpy as np
import jax
import jax.numpy as jnp
from jax.experimental import pallas as pl
from jax.experimental.pallas import tpu as pltpu

# ----------------------------- configuration -------------------------------
B = 2            # batch
T = 8            # sequence length
INPUT_DIM = 16
EMBED_DIM = 32
HIDDEN_DIM = 32
NUM_LAYERS = 2
DROPOUT = 0.0    # nn.GRU applies dropout only in training; 0.0 => exact match

HIGH = jax.lax.Precision.HIGHEST


# ------------------------------ Pallas kernel ------------------------------
def _make_kernel(Tt, Bp, L, H):
    """Kernel closure over the static problem sizes (everything is unrolled)."""
    H2 = 2 * H
    H3 = 3 * H

    def kernel(
        x_ref,        # (T*Bp, Din)   time-major, batch-padded input sequence
        h0_ref,       # (L, Bp, H)    initial hidden state (batch-padded)
        w_in0_ref,    # (Din, 3H)     fused embed @ layer-0 input weights
        w_ih_ref,     # (max(L-1,1), H, 3H)  input weights for layers >= 1
        w_hh_ref,     # (L, H, 3H)    hidden weights, native fused gate layout
        b_x_ref,      # (L, 1, 3H)    input-side bias; r/z already include b_hh
        b_hn_ref,     # (L, 1, H)     n-gate hidden bias (stays inside r-mult)
        w_comb_ref,   # (H, Din)      fc_out.weight^T + fc_out_residual.weight^T
        b_comb_ref,   # (1, Din)      fc_out.bias + fc_out_residual.bias
        out_ref,      # (T*Bp, Din)   plain_output (time-major, padded batch)
        hn_ref,       # (L, Bp, H)    final hidden state
        y_scr,        # VMEM (T*Bp, H) final-layer outputs scratch
    ):
        # ---- layer-0 input-side gates for ALL timesteps: one fused MXU dot.
        # Off the recurrence critical path -> HIGHEST precision is ~free.
        xg0 = (jnp.dot(x_ref[...], w_in0_ref[...],
                       precision=HIGH, preferred_element_type=jnp.float32)
               + b_x_ref[0])                                       # (T*Bp, 3H)

        prev_outs = None  # per-timestep hidden states of the previous layer
        for l in range(L):
            w_hh_l = w_hh_ref[l]                                   # (H, 3H)
            # hoisted broadcasts (JAX does not CSE broadcast_in_dim)
            b_hn_b = jnp.broadcast_to(b_hn_ref[l], (Bp, H))        # (Bp, H)
            if l > 0:
                w_ih_l = w_ih_ref[l - 1]                           # (H, 3H)
                b_x_b = jnp.broadcast_to(b_x_ref[l], (Bp, H3))     # (Bp, 3H)

            h = h0_ref[l]                                          # (Bp, H)
            outs = []
            for t in range(Tt):            # fully unrolled recurrence
                if l == 0:
                    xg = xg0[t * Bp:(t + 1) * Bp, :]               # static slice
                else:
                    # per-step input dot -> layer l step t depends only on
                    # layer l-1 step t (wavefront dependency structure)
                    xg = jnp.dot(prev_outs[t], w_ih_l,
                                 preferred_element_type=jnp.float32) + b_x_b
                hg = jnp.dot(h, w_hh_l,
                             preferred_element_type=jnp.float32)   # (Bp, 3H)
                # one sigmoid over the fused r|z slab (single EUP push)
                rz = jax.nn.sigmoid(xg[:, :H2] + hg[:, :H2])       # (Bp, 2H)
                r = rz[:, :H]
                z = rz[:, H:]
                n = jnp.tanh(xg[:, H2:] + r * (hg[:, H2:] + b_hn_b))
                h = (1.0 - z) * n + z * h
                outs.append(h)
                if l == L - 1:
                    # aligned full-tile scratch write (Bp = 8 sublanes)
                    y_scr[t * Bp:(t + 1) * Bp, :] = h

            hn_ref[l] = h
            prev_outs = outs

        # ---- fused output projection: fc_out + fc_out_residual ----
        out_ref[...] = (jnp.dot(y_scr[...], w_comb_ref[...],
                                precision=HIGH,
                                preferred_element_type=jnp.float32)
                        + b_comb_ref[...])

    return kernel


# ------------------------------ JAX wrapper --------------------------------
def residual_seq_net_forward(seq_events, lengths, hidden, params):
    """seq_events: (B, T, Din); hidden: (L, B, H). Returns (out, None, hN)."""
    del lengths  # unused in the GRU branch, exactly as in the PyTorch module
    (w_emb, w_ih, w_hh, b_ih, b_hh, w_out, b_out, w_res, b_res) = params

    Bb, Tt, Din = seq_events.shape
    L, _, H = hidden.shape
    E = w_emb.shape[1]
    assert E == H, "PyTorch GRU requires input_size == hidden_size for layers > 0"
    Bp = ((Bb + 7) // 8) * 8                       # pad batch to a sublane tile

    # --- parameter preprocessing (all exact rewrites) ---
    # fold embed_input into layer-0's input weights (both linear, no bias between)
    w_in0 = w_emb @ w_ih[0]                                        # (Din, 3H)
    w_ih_rest = w_ih[1:] if L > 1 else jnp.zeros((1, H, 3 * H), w_ih.dtype)
    # fold r/z hidden biases into the input-side bias (exact: both are outside
    # the nonlinearity); keep only the n-gate hidden bias separate.
    b_x = b_ih.at[:, :, :2 * H].add(b_hh[:, :, :2 * H])            # (L, 1, 3H)
    b_hn = b_hh[:, :, 2 * H:]                                      # (L, 1, H)
    # fuse the two output projections: y@W1 + b1 + y@W2 + b2 = y@(W1+W2)+(b1+b2)
    w_comb = w_out + w_res
    b_comb = b_out + b_res

    # time-major, batch-padded, 2D lane-contiguous input
    # (transpose + pad + reshape fuse into one small XLA op)
    x_tm = jnp.transpose(seq_events, (1, 0, 2))                    # (T, B, Din)
    x_tm = jnp.pad(x_tm, ((0, 0), (0, Bp - Bb), (0, 0)))
    x2d = x_tm.reshape(Tt * Bp, Din)
    h0p = jnp.pad(hidden, ((0, 0), (0, Bp - Bb), (0, 0)))          # (L, Bp, H)

    vmem = pl.BlockSpec(memory_space=pltpu.MemorySpace.VMEM)
    out2d, hn = pl.pallas_call(
        _make_kernel(Tt, Bp, L, H),
        out_shape=(
            jax.ShapeDtypeStruct((Tt * Bp, Din), jnp.float32),
            jax.ShapeDtypeStruct((L, Bp, H), jnp.float32),
        ),
        in_specs=[vmem] * 9,
        out_specs=(vmem, vmem),
        scratch_shapes=[pltpu.VMEM((Tt * Bp, H), jnp.float32)],
    )(x2d, h0p, w_in0, w_ih_rest, w_hh, b_x, b_hn, w_comb, b_comb)

    plain_output = jnp.transpose(
        out2d.reshape(Tt, Bp, Din)[:, :Bb, :], (1, 0, 2))          # (B, T, Din)
    return plain_output, None, hn[:, :Bb, :]


# --------------------- float64 numpy reference (check) ----------------------
def reference_forward_np(seq_events, hidden, params):
    (w_emb, w_ih, w_hh, b_ih, b_hh, w_out, b_out, w_res, b_res) = [
        np.asarray(p, dtype=np.float64) for p in params]
    x = np.asarray(seq_events, np.float64)
    h_all = np.asarray(hidden, np.float64)
    H = w_hh.shape[1]

    def sigm(v):
        return 1.0 / (1.0 + np.exp(-v))

    layer_in = x @ w_emb                                   # (B, T, E)
    h_finals = []
    for l in range(w_ih.shape[0]):
        h = h_all[l]
        outs = []
        for t in range(layer_in.shape[1]):
            xg = layer_in[:, t, :] @ w_ih[l] + b_ih[l]
            hg = h @ w_hh[l] + b_hh[l]
            r = sigm(xg[:, :H] + hg[:, :H])
            z = sigm(xg[:, H:2 * H] + hg[:, H:2 * H])
            n = np.tanh(xg[:, 2 * H:] + r * hg[:, 2 * H:])
            h = (1.0 - z) * n + z * h
            outs.append(h)
        h_finals.append(h)
        layer_in = np.stack(outs, axis=1)
    out = layer_in @ w_out + b_out + layer_in @ w_res + b_res
    return out, np.stack(h_finals)


# --------------------------------- main -------------------------------------
if __name__ == "__main__":
    key = jax.random.PRNGKey(0)
    ks = jax.random.split(key, 12)
    scale = 0.1

    # Deterministic synthetic parameters (shapes implied by the nn.Module,
    # stored transposed so x @ W matches PyTorch's x @ W^T).
    w_emb = scale * jax.random.normal(ks[0], (INPUT_DIM, EMBED_DIM), jnp.float32)
    w_ih = scale * jax.random.normal(ks[1], (NUM_LAYERS, EMBED_DIM, 3 * HIDDEN_DIM), jnp.float32)
    w_hh = scale * jax.random.normal(ks[2], (NUM_LAYERS, HIDDEN_DIM, 3 * HIDDEN_DIM), jnp.float32)
    b_ih = scale * jax.random.normal(ks[3], (NUM_LAYERS, 1, 3 * HIDDEN_DIM), jnp.float32)
    b_hh = scale * jax.random.normal(ks[4], (NUM_LAYERS, 1, 3 * HIDDEN_DIM), jnp.float32)
    w_out = scale * jax.random.normal(ks[5], (HIDDEN_DIM, INPUT_DIM), jnp.float32)
    b_out = scale * jax.random.normal(ks[6], (1, INPUT_DIM), jnp.float32)
    w_res = scale * jax.random.normal(ks[7], (HIDDEN_DIM, INPUT_DIM), jnp.float32)
    b_res = scale * jax.random.normal(ks[8], (1, INPUT_DIM), jnp.float32)
    params = (w_emb, w_ih, w_hh, b_ih, b_hh, w_out, b_out, w_res, b_res)

    # Example inputs.
    seq_events = jax.random.normal(ks[9], (B, T, INPUT_DIM), jnp.float32)
    lengths = jnp.full((B,), T, dtype=jnp.int32)
    hidden0 = jax.random.normal(ks[10], (NUM_LAYERS, B, HIDDEN_DIM), jnp.float32)

    fwd = jax.jit(lambda x, ln, h: residual_seq_net_forward(x, ln, h, params))
    plain_output, none_out, hidden_n = fwd(seq_events, lengths, hidden0)
    jax.block_until_ready((plain_output, hidden_n))

    # Correctness check against a float64 numpy reference.  The per-step
    # recurrence dots run at default MXU precision (performance feedback), so
    # tolerance is relaxed; semantic bugs (gate order, bias placement) would
    # show up at O(0.1), not O(1e-3).
    ref_out, ref_hn = reference_forward_np(seq_events, hidden0, params)
    np.testing.assert_allclose(np.asarray(plain_output), ref_out,
                               rtol=2e-2, atol=2e-2)
    np.testing.assert_allclose(np.asarray(hidden_n), ref_hn,
                               rtol=2e-2, atol=2e-2)
    assert plain_output.shape == (B, T, INPUT_DIM)
    assert hidden_n.shape == (NUM_LAYERS, B, HIDDEN_DIM)
    assert none_out is None

    print("KERNEL_OK")
</pallas_src>

<mosaic_0001>
module attributes {stable_mosaic.version = 11 : i64} {
  func.func @kernel(%arg0: memref<64x16xf32, #tpu.memory_space<vmem>>, %arg1: memref<2x8x32xf32, #tpu.memory_space<vmem>>, %arg2: memref<16x96xf32, #tpu.memory_space<vmem>>, %arg3: memref<1x32x96xf32, #tpu.memory_space<vmem>>, %arg4: memref<2x32x96xf32, #tpu.memory_space<vmem>>, %arg5: memref<2x1x96xf32, #tpu.memory_space<vmem>>, %arg6: memref<2x1x32xf32, #tpu.memory_space<vmem>>, %arg7: memref<32x16xf32, #tpu.memory_space<vmem>>, %arg8: memref<1x16xf32, #tpu.memory_space<vmem>>, %arg9: memref<64x16xf32, #tpu.memory_space<vmem>>, %arg10: memref<2x8x32xf32, #tpu.memory_space<vmem>>, %arg11: memref<64x32xf32, #tpu.memory_space<vmem>>) attributes {dimension_semantics = [], scalar_prefetch = 0 : i64, scratch_operands = 1 : i64, tpu.core_type = #tpu.core_type<tc>} {
    %c0 = arith.constant 0 : index
    %c0_0 = arith.constant 0 : index
    %0 = vector.load %arg0[%c0, %c0_0] : memref<64x16xf32, #tpu.memory_space<vmem>>, vector<64x16xf32>
    %c0_1 = arith.constant 0 : index
    %c0_2 = arith.constant 0 : index
    %1 = vector.load %arg2[%c0_1, %c0_2] : memref<16x96xf32, #tpu.memory_space<vmem>>, vector<16x96xf32>
    %cst = arith.constant dense<0.000000e+00> : vector<64x96xf32>
    %2 = tpu.matmul %0, %1, %cst {dimension_numbers = #tpu.dot_dimension_numbers<[1], [0], [0], [1], [0, 0, 1, 1], [], []>, precision = #tpu.contract_precision<fp32>} : vector<64x16xf32>, vector<16x96xf32>, vector<64x96xf32> -> vector<64x96xf32>
    %c0_3 = arith.constant 0 : index
    %c0_4 = arith.constant 0 : index
    %c0_5 = arith.constant 0 : index
    %3 = vector.load %arg5[%c0_3, %c0_4, %c0_5] : memref<2x1x96xf32, #tpu.memory_space<vmem>>, vector<1x1x96xf32>
    %4 = vector.shape_cast %3 : vector<1x1x96xf32> to vector<1x96xf32>
    %5 = vector.broadcast %4 : vector<1x96xf32> to vector<64x96xf32>
    %6 = arith.addf %2, %5 : vector<64x96xf32>
    %c0_6 = arith.constant 0 : index
    %c0_7 = arith.constant 0 : index
    %c0_8 = arith.constant 0 : index
    %7 = vector.load %arg4[%c0_6, %c0_7, %c0_8] : memref<2x32x96xf32, #tpu.memory_space<vmem>>, vector<1x32x96xf32>
    %8 = vector.shape_cast %7 : vector<1x32x96xf32> to vector<32x96xf32>
    %c0_9 = arith.constant 0 : index
    %c0_10 = arith.constant 0 : index
    %c0_11 = arith.constant 0 : index
    %9 = vector.load %arg6[%c0_9, %c0_10, %c0_11] : memref<2x1x32xf32, #tpu.memory_space<vmem>>, vector<1x1x32xf32>
    %10 = vector.shape_cast %9 : vector<1x1x32xf32> to vector<1x32xf32>
    %11 = vector.shape_cast %10 : vector<1x32xf32> to vector<1x32xf32>
    %12 = vector.broadcast %11 : vector<1x32xf32> to vector<8x32xf32>
    %c0_12 = arith.constant 0 : index
    %c0_13 = arith.constant 0 : index
    %c0_14 = arith.constant 0 : index
    %13 = vector.load %arg1[%c0_12, %c0_13, %c0_14] : memref<2x8x32xf32, #tpu.memory_space<vmem>>, vector<1x8x32xf32>
    %14 = vector.shape_cast %13 : vector<1x8x32xf32> to vector<8x32xf32>
    %15 = vector.extract_strided_slice %6 {offsets = [0, 0], sizes = [8, 96], strides = [1, 1]} : vector<64x96xf32> to vector<8x96xf32>
    %cst_15 = arith.constant dense<0.000000e+00> : vector<8x96xf32>
    %16 = tpu.matmul %14, %8, %cst_15 {dimension_numbers = #tpu.dot_dimension_numbers<[1], [0], [0], [1], [0, 0, 1, 1], [], []>} : vector<8x32xf32>, vector<32x96xf32>, vector<8x96xf32> -> vector<8x96xf32>
    %17 = vector.extract_strided_slice %15 {offsets = [0, 0], sizes = [8, 64], strides = [1, 1]} : vector<8x96xf32> to vector<8x64xf32>
    %18 = vector.extract_strided_slice %16 {offsets = [0, 0], sizes = [8, 64], strides = [1, 1]} : vector<8x96xf32> to vector<8x64xf32>
    %19 = arith.addf %17, %18 : vector<8x64xf32>
    %20 = arith.negf %19 : vector<8x64xf32>
    %21 = math.exp %20 : vector<8x64xf32>
    %cst_16 = arith.constant 1.000000e+00 : f32
    %22 = vector.broadcast %cst_16 : f32 to vector<8x64xf32>
    %23 = arith.addf %22, %21 : vector<8x64xf32>
    %24 = arith.divf %22, %23 : vector<8x64xf32>
    %25 = vector.extract_strided_slice %24 {offsets = [0, 0], sizes = [8, 32], strides = [1, 1]} : vector<8x64xf32> to vector<8x32xf32>
    %26 = vector.extract_strided_slice %24 {offsets = [0, 32], sizes = [8, 32], strides = [1, 1]} : vector<8x64xf32> to vector<8x32xf32>
    %27 = vector.extract_strided_slice %15 {offsets = [0, 64], sizes = [8, 32], strides = [1, 1]} : vector<8x96xf32> to vector<8x32xf32>
    %28 = vector.extract_strided_slice %16 {offsets = [0, 64], sizes = [8, 32], strides = [1, 1]} : vector<8x96xf32> to vector<8x32xf32>
    %29 = arith.addf %28, %12 : vector<8x32xf32>
    %30 = arith.mulf %25, %29 : vector<8x32xf32>
    %31 = arith.addf %27, %30 : vector<8x32xf32>
    %32 = math.tanh %31 : vector<8x32xf32>
    %cst_17 = arith.constant 1.000000e+00 : f32
    %33 = vector.broadcast %cst_17 : f32 to vector<8x32xf32>
    %34 = arith.subf %33, %26 : vector<8x32xf32>
    %35 = arith.mulf %34, %32 : vector<8x32xf32>
    %36 = arith.mulf %26, %14 : vector<8x32xf32>
    %37 = arith.addf %35, %36 : vector<8x32xf32>
    %38 = vector.extract_strided_slice %6 {offsets = [8, 0], sizes = [8, 96], strides = [1, 1]} : vector<64x96xf32> to vector<8x96xf32>
    %cst_18 = arith.constant dense<0.000000e+00> : vector<8x96xf32>
    %39 = tpu.matmul %37, %8, %cst_18 {dimension_numbers = #tpu.dot_dimension_numbers<[1], [0], [0], [1], [0, 0, 1, 1], [], []>} : vector<8x32xf32>, vector<32x96xf32>, vector<8x96xf32> -> vector<8x96xf32>
    %40 = vector.extract_strided_slice %38 {offsets = [0, 0], sizes = [8, 64], strides = [1, 1]} : vector<8x96xf32> to vector<8x64xf32>
    %41 = vector.extract_strided_slice %39 {offsets = [0, 0], sizes = [8, 64], strides = [1, 1]} : vector<8x96xf32> to vector<8x64xf32>
    %42 = arith.addf %40, %41 : vector<8x64xf32>
    %43 = arith.negf %42 : vector<8x64xf32>
    %44 = math.exp %43 : vector<8x64xf32>
    %cst_19 = arith.constant 1.000000e+00 : f32
    %45 = vector.broadcast %cst_19 : f32 to vector<8x64xf32>
    %46 = arith.addf %45, %44 : vector<8x64xf32>
    %47 = arith.divf %45, %46 : vector<8x64xf32>
    %48 = vector.extract_strided_slice %47 {offsets = [0, 0], sizes = [8, 32], strides = [1, 1]} : vector<8x64xf32> to vector<8x32xf32>
    %49 = vector.extract_strided_slice %47 {offsets = [0, 32], sizes = [8, 32], strides = [1, 1]} : vector<8x64xf32> to vector<8x32xf32>
    %50 = vector.extract_strided_slice %38 {offsets = [0, 64], sizes = [8, 32], strides = [1, 1]} : vector<8x96xf32> to vector<8x32xf32>
    %51 = vector.extract_strided_slice %39 {offsets = [0, 64], sizes = [8, 32], strides = [1, 1]} : vector<8x96xf32> to vector<8x32xf32>
    %52 = arith.addf %51, %12 : vector<8x32xf32>
    %53 = arith.mulf %48, %52 : vector<8x32xf32>
    %54 = arith.addf %50, %53 : vector<8x32xf32>
    %55 = math.tanh %54 : vector<8x32xf32>
    %cst_20 = arith.constant 1.000000e+00 : f32
    %56 = vector.broadcast %cst_20 : f32 to vector<8x32xf32>
    %57 = arith.subf %56, %49 : vector<8x32xf32>
    %58 = arith.mulf %57, %55 : vector<8x32xf32>
    %59 = arith.mulf %49, %37 : vector<8x32xf32>
    %60 = arith.addf %58, %59 : vector<8x32xf32>
    %61 = vector.extract_strided_slice %6 {offsets = [16, 0], sizes = [8, 96], strides = [1, 1]} : vector<64x96xf32> to vector<8x96xf32>
    %cst_21 = arith.constant dense<0.000000e+00> : vector<8x96xf32>
    %62 = tpu.matmul %60, %8, %cst_21 {dimension_numbers = #tpu.dot_dimension_numbers<[1], [0], [0], [1], [0, 0, 1, 1], [], []>} : vector<8x32xf32>, vector<32x96xf32>, vector<8x96xf32> -> vector<8x96xf32>
    %63 = vector.extract_strided_slice %61 {offsets = [0, 0], sizes = [8, 64], strides = [1, 1]} : vector<8x96xf32> to vector<8x64xf32>
    %64 = vector.extract_strided_slice %62 {offsets = [0, 0], sizes = [8, 64], strides = [1, 1]} : vector<8x96xf32> to vector<8x64xf32>
    %65 = arith.addf %63, %64 : vector<8x64xf32>
    %66 = arith.negf %65 : vector<8x64xf32>
    %67 = math.exp %66 : vector<8x64xf32>
    %cst_22 = arith.constant 1.000000e+00 : f32
    %68 = vector.broadcast %cst_22 : f32 to vector<8x64xf32>
    %69 = arith.addf %68, %67 : vector<8x64xf32>
    %70 = arith.divf %68, %69 : vector<8x64xf32>
    %71 = vector.extract_strided_slice %70 {offsets = [0, 0], sizes = [8, 32], strides = [1, 1]} : vector<8x64xf32> to vector<8x32xf32>
    %72 = vector.extract_strided_slice %70 {offsets = [0, 32], sizes = [8, 32], strides = [1, 1]} : vector<8x64xf32> to vector<8x32xf32>
    %73 = vector.extract_strided_slice %61 {offsets = [0, 64], sizes = [8, 32], strides = [1, 1]} : vector<8x96xf32> to vector<8x32xf32>
    %74 = vector.extract_strided_slice %62 {offsets = [0, 64], sizes = [8, 32], strides = [1, 1]} : vector<8x96xf32> to vector<8x32xf32>
    %75 = arith.addf %74, %12 : vector<8x32xf32>
    %76 = arith.mulf %71, %75 : vector<8x32xf32>
    %77 = arith.addf %73, %76 : vector<8x32xf32>
    %78 = math.tanh %77 : vector<8x32xf32>
    %cst_23 = arith.constant 1.000000e+00 : f32
    %79 = vector.broadcast %cst_23 : f32 to vector<8x32xf32>
    %80 = arith.subf %79, %72 : vector<8x32xf32>
    %81 = arith.mulf %80, %78 : vector<8x32xf32>
    %82 = arith.mulf %72, %60 : vector<8x32xf32>
    %83 = arith.addf %81, %82 : vector<8x32xf32>
    %84 = vector.extract_strided_slice %6 {offsets = [24, 0], sizes = [8, 96], strides = [1, 1]} : vector<64x96xf32> to vector<8x96xf32>
    %cst_24 = arith.constant dense<0.000000e+00> : vector<8x96xf32>
    %85 = tpu.matmul %83, %8, %cst_24 {dimension_numbers = #tpu.dot_dimension_numbers<[1], [0], [0], [1], [0, 0, 1, 1], [], []>} : vector<8x32xf32>, vector<32x96xf32>, vector<8x96xf32> -> vector<8x96xf32>
    %86 = vector.extract_strided_slice %84 {offsets = [0, 0], sizes = [8, 64], strides = [1, 1]} : vector<8x96xf32> to vector<8x64xf32>
    %87 = vector.extract_strided_slice %85 {offsets = [0, 0], sizes = [8, 64], strides = [1, 1]} : vector<8x96xf32> to vector<8x64xf32>
    %88 = arith.addf %86, %87 : vector<8x64xf32>
    %89 = arith.negf %88 : vector<8x64xf32>
    %90 = math.exp %89 : vector<8x64xf32>
    %cst_25 = arith.constant 1.000000e+00 : f32
    %91 = vector.broadcast %cst_25 : f32 to vector<8x64xf32>
    %92 = arith.addf %91, %90 : vector<8x64xf32>
    %93 = arith.divf %91, %92 : vector<8x64xf32>
    %94 = vector.extract_strided_slice %93 {offsets = [0, 0], sizes = [8, 32], strides = [1, 1]} : vector<8x64xf32> to vector<8x32xf32>
    %95 = vector.extract_strided_slice %93 {offsets = [0, 32], sizes = [8, 32], strides = [1, 1]} : vector<8x64xf32> to vector<8x32xf32>
    %96 = vector.extract_strided_slice %84 {offsets = [0, 64], sizes = [8, 32], strides = [1, 1]} : vector<8x96xf32> to vector<8x32xf32>
    %97 = vector.extract_strided_slice %85 {offsets = [0, 64], sizes = [8, 32], strides = [1, 1]} : vector<8x96xf32> to vector<8x32xf32>
    %98 = arith.addf %97, %12 : vector<8x32xf32>
    %99 = arith.mulf %94, %98 : vector<8x32xf32>
    %100 = arith.addf %96, %99 : vector<8x32xf32>
    %101 = math.tanh %100 : vector<8x32xf32>
    %cst_26 = arith.constant 1.000000e+00 : f32
    %102 = vector.broadcast %cst_26 : f32 to vector<8x32xf32>
    %103 = arith.subf %102, %95 : vector<8x32xf32>
    %104 = arith.mulf %103, %101 : vector<8x32xf32>
    %105 = arith.mulf %95, %83 : vector<8x32xf32>
    %106 = arith.addf %104, %105 : vector<8x32xf32>
    %107 = vector.extract_strided_slice %6 {offsets = [32, 0], sizes = [8, 96], strides = [1, 1]} : vector<64x96xf32> to vector<8x96xf32>
    %cst_27 = arith.constant dense<0.000000e+00> : vector<8x96xf32>
    %108 = tpu.matmul %106, %8, %cst_27 {dimension_numbers = #tpu.dot_dimension_numbers<[1], [0], [0], [1], [0, 0, 1, 1], [], []>} : vector<8x32xf32>, vector<32x96xf32>, vector<8x96xf32> -> vector<8x96xf32>
    %109 = vector.extract_strided_slice %107 {offsets = [0, 0], sizes = [8, 64], strides = [1, 1]} : vector<8x96xf32> to vector<8x64xf32>
    %110 = vector.extract_strided_slice %108 {offsets = [0, 0], sizes = [8, 64], strides = [1, 1]} : vector<8x96xf32> to vector<8x64xf32>
    %111 = arith.addf %109, %110 : vector<8x64xf32>
    %112 = arith.negf %111 : vector<8x64xf32>
    %113 = math.exp %112 : vector<8x64xf32>
    %cst_28 = arith.constant 1.000000e+00 : f32
    %114 = vector.broadcast %cst_28 : f32 to vector<8x64xf32>
    %115 = arith.addf %114, %113 : vector<8x64xf32>
    %116 = arith.divf %114, %115 : vector<8x64xf32>
    %117 = vector.extract_strided_slice %116 {offsets = [0, 0], sizes = [8, 32], strides = [1, 1]} : vector<8x64xf32> to vector<8x32xf32>
    %118 = vector.extract_strided_slice %116 {offsets = [0, 32], sizes = [8, 32], strides = [1, 1]} : vector<8x64xf32> to vector<8x32xf32>
    %119 = vector.extract_strided_slice %107 {offsets = [0, 64], sizes = [8, 32], strides = [1, 1]} : vector<8x96xf32> to vector<8x32xf32>
    %120 = vector.extract_strided_slice %108 {offsets = [0, 64], sizes = [8, 32], strides = [1, 1]} : vector<8x96xf32> to vector<8x32xf32>
    %121 = arith.addf %120, %12 : vector<8x32xf32>
    %122 = arith.mulf %117, %121 : vector<8x32xf32>
    %123 = arith.addf %119, %122 : vector<8x32xf32>
    %124 = math.tanh %123 : vector<8x32xf32>
    %cst_29 = arith.constant 1.000000e+00 : f32
    %125 = vector.broadcast %cst_29 : f32 to vector<8x32xf32>
    %126 = arith.subf %125, %118 : vector<8x32xf32>
    %127 = arith.mulf %126, %124 : vector<8x32xf32>
    %128 = arith.mulf %118, %106 : vector<8x32xf32>
    %129 = arith.addf %127, %128 : vector<8x32xf32>
    %130 = vector.extract_strided_slice %6 {offsets = [40, 0], sizes = [8, 96], strides = [1, 1]} : vector<64x96xf32> to vector<8x96xf32>
    %cst_30 = arith.constant dense<0.000000e+00> : vector<8x96xf32>
    %131 = tpu.matmul %129, %8, %cst_30 {dimension_numbers = #tpu.dot_dimension_numbers<[1], [0], [0], [1], [0, 0, 1, 1], [], []>} : vector<8x32xf32>, vector<32x96xf32>, vector<8x96xf32> -> vector<8x96xf32>
    %132 = vector.extract_strided_slice %130 {offsets = [0, 0], sizes = [8, 64], strides = [1, 1]} : vector<8x96xf32> to vector<8x64xf32>
    %133 = vector.extract_strided_slice %131 {offsets = [0, 0], sizes = [8, 64], strides = [1, 1]} : vector<8x96xf32> to vector<8x64xf32>
    %134 = arith.addf %132, %133 : vector<8x64xf32>
    %135 = arith.negf %134 : vector<8x64xf32>
    %136 = math.exp %135 : vector<8x64xf32>
    %cst_31 = arith.constant 1.000000e+00 : f32
    %137 = vector.broadcast %cst_31 : f32 to vector<8x64xf32>
    %138 = arith.addf %137, %136 : vector<8x64xf32>
    %139 = arith.divf %137, %138 : vector<8x64xf32>
    %140 = vector.extract_strided_slice %139 {offsets = [0, 0], sizes = [8, 32], strides = [1, 1]} : vector<8x64xf32> to vector<8x32xf32>
    %141 = vector.extract_strided_slice %139 {offsets = [0, 32], sizes = [8, 32], strides = [1, 1]} : vector<8x64xf32> to vector<8x32xf32>
    %142 = vector.extract_strided_slice %130 {offsets = [0, 64], sizes = [8, 32], strides = [1, 1]} : vector<8x96xf32> to vector<8x32xf32>
    %143 = vector.extract_strided_slice %131 {offsets = [0, 64], sizes = [8, 32], strides = [1, 1]} : vector<8x96xf32> to vector<8x32xf32>
    %144 = arith.addf %143, %12 : vector<8x32xf32>
    %145 = arith.mulf %140, %144 : vector<8x32xf32>
    %146 = arith.addf %142, %145 : vector<8x32xf32>
    %147 = math.tanh %146 : vector<8x32xf32>
    %cst_32 = arith.constant 1.000000e+00 : f32
    %148 = vector.broadcast %cst_32 : f32 to vector<8x32xf32>
    %149 = arith.subf %148, %141 : vector<8x32xf32>
    %150 = arith.mulf %149, %147 : vector<8x32xf32>
    %151 = arith.mulf %141, %129 : vector<8x32xf32>
    %152 = arith.addf %150, %151 : vector<8x32xf32>
    %153 = vector.extract_strided_slice %6 {offsets = [48, 0], sizes = [8, 96], strides = [1, 1]} : vector<64x96xf32> to vector<8x96xf32>
    %cst_33 = arith.constant dense<0.000000e+00> : vector<8x96xf32>
    %154 = tpu.matmul %152, %8, %cst_33 {dimension_numbers = #tpu.dot_dimension_numbers<[1], [0], [0], [1], [0, 0, 1, 1], [], []>} : vector<8x32xf32>, vector<32x96xf32>, vector<8x96xf32> -> vector<8x96xf32>
    %155 = vector.extract_strided_slice %153 {offsets = [0, 0], sizes = [8, 64], strides = [1, 1]} : vector<8x96xf32> to vector<8x64xf32>
    %156 = vector.extract_strided_slice %154 {offsets = [0, 0], sizes = [8, 64], strides = [1, 1]} : vector<8x96xf32> to vector<8x64xf32>
    %157 = arith.addf %155, %156 : vector<8x64xf32>
    %158 = arith.negf %157 : vector<8x64xf32>
    %159 = math.exp %158 : vector<8x64xf32>
    %cst_34 = arith.constant 1.000000e+00 : f32
    %160 = vector.broadcast %cst_34 : f32 to vector<8x64xf32>
    %161 = arith.addf %160, %159 : vector<8x64xf32>
    %162 = arith.divf %160, %161 : vector<8x64xf32>
    %163 = vector.extract_strided_slice %162 {offsets = [0, 0], sizes = [8, 32], strides = [1, 1]} : vector<8x64xf32> to vector<8x32xf32>
    %164 = vector.extract_strided_slice %162 {offsets = [0, 32], sizes = [8, 32], strides = [1, 1]} : vector<8x64xf32> to vector<8x32xf32>
    %165 = vector.extract_strided_slice %153 {offsets = [0, 64], sizes = [8, 32], strides = [1, 1]} : vector<8x96xf32> to vector<8x32xf32>
    %166 = vector.extract_strided_slice %154 {offsets = [0, 64], sizes = [8, 32], strides = [1, 1]} : vector<8x96xf32> to vector<8x32xf32>
    %167 = arith.addf %166, %12 : vector<8x32xf32>
    %168 = arith.mulf %163, %167 : vector<8x32xf32>
    %169 = arith.addf %165, %168 : vector<8x32xf32>
    %170 = math.tanh %169 : vector<8x32xf32>
    %cst_35 = arith.constant 1.000000e+00 : f32
    %171 = vector.broadcast %cst_35 : f32 to vector<8x32xf32>
    %172 = arith.subf %171, %164 : vector<8x32xf32>
    %173 = arith.mulf %172, %170 : vector<8x32xf32>
    %174 = arith.mulf %164, %152 : vector<8x32xf32>
    %175 = arith.addf %173, %174 : vector<8x32xf32>
    %176 = vector.extract_strided_slice %6 {offsets = [56, 0], sizes = [8, 96], strides = [1, 1]} : vector<64x96xf32> to vector<8x96xf32>
    %cst_36 = arith.constant dense<0.000000e+00> : vector<8x96xf32>
    %177 = tpu.matmul %175, %8, %cst_36 {dimension_numbers = #tpu.dot_dimension_numbers<[1], [0], [0], [1], [0, 0, 1, 1], [], []>} : vector<8x32xf32>, vector<32x96xf32>, vector<8x96xf32> -> vector<8x96xf32>
    %178 = vector.extract_strided_slice %176 {offsets = [0, 0], sizes = [8, 64], strides = [1, 1]} : vector<8x96xf32> to vector<8x64xf32>
    %179 = vector.extract_strided_slice %177 {offsets = [0, 0], sizes = [8, 64], strides = [1, 1]} : vector<8x96xf32> to vector<8x64xf32>
    %180 = arith.addf %178, %179 : vector<8x64xf32>
    %181 = arith.negf %180 : vector<8x64xf32>
    %182 = math.exp %181 : vector<8x64xf32>
    %cst_37 = arith.constant 1.000000e+00 : f32
    %183 = vector.broadcast %cst_37 : f32 to vector<8x64xf32>
    %184 = arith.addf %183, %182 : vector<8x64xf32>
    %185 = arith.divf %183, %184 : vector<8x64xf32>
    %186 = vector.extract_strided_slice %185 {offsets = [0, 0], sizes = [8, 32], strides = [1, 1]} : vector<8x64xf32> to vector<8x32xf32>
    %187 = vector.extract_strided_slice %185 {offsets = [0, 32], sizes = [8, 32], strides = [1, 1]} : vector<8x64xf32> to vector<8x32xf32>
    %188 = vector.extract_strided_slice %176 {offsets = [0, 64], sizes = [8, 32], strides = [1, 1]} : vector<8x96xf32> to vector<8x32xf32>
    %189 = vector.extract_strided_slice %177 {offsets = [0, 64], sizes = [8, 32], strides = [1, 1]} : vector<8x96xf32> to vector<8x32xf32>
    %190 = arith.addf %189, %12 : vector<8x32xf32>
    %191 = arith.mulf %186, %190 : vector<8x32xf32>
    %192 = arith.addf %188, %191 : vector<8x32xf32>
    %193 = math.tanh %192 : vector<8x32xf32>
    %cst_38 = arith.constant 1.000000e+00 : f32
    %194 = vector.broadcast %cst_38 : f32 to vector<8x32xf32>
    %195 = arith.subf %194, %187 : vector<8x32xf32>
    %196 = arith.mulf %195, %193 : vector<8x32xf32>
    %197 = arith.mulf %187, %175 : vector<8x32xf32>
    %198 = arith.addf %196, %197 : vector<8x32xf32>
    %c0_39 = arith.constant 0 : index
    %c0_40 = arith.constant 0 : index
    %c0_41 = arith.constant 0 : index
    %199 = vector.load %arg10[%c0_39, %c0_40, %c0_41] : memref<2x8x32xf32, #tpu.memory_space<vmem>>, vector<1x8x32xf32>
    %200 = vector.shape_cast %199 : vector<1x8x32xf32> to vector<8x32xf32>
    %201 = vector.shape_cast %198 : vector<8x32xf32> to vector<1x8x32xf32>
    tpu.vector_store %arg10[%c0_39, %c0_40, %c0_41], %201 {strides = array<i32>} : memref<2x8x32xf32, #tpu.memory_space<vmem>>, vector<1x8x32xf32>,
    %c1 = arith.constant 1 : index
    %c0_42 = arith.constant 0 : index
    %c0_43 = arith.constant 0 : index
    %202 = vector.load %arg4[%c1, %c0_42, %c0_43] : memref<2x32x96xf32, #tpu.memory_space<vmem>>, vector<1x32x96xf32>
    %203 = vector.shape_cast %202 : vector<1x32x96xf32> to vector<32x96xf32>
    %c1_44 = arith.constant 1 : index
    %c0_45 = arith.constant 0 : index
    %c0_46 = arith.constant 0 : index
    %204 = vector.load %arg6[%c1_44, %c0_45, %c0_46] : memref<2x1x32xf32, #tpu.memory_space<vmem>>, vector<1x1x32xf32>
    %205 = vector.shape_cast %204 : vector<1x1x32xf32> to vector<1x32xf32>
    %206 = vector.shape_cast %205 : vector<1x32xf32> to vector<1x32xf32>
    %207 = vector.broadcast %206 : vector<1x32xf32> to vector<8x32xf32>
    %c0_47 = arith.constant 0 : index
    %c0_48 = arith.constant 0 : index
    %c0_49 = arith.constant 0 : index
    %208 = vector.load %arg3[%c0_47, %c0_48, %c0_49] : memref<1x32x96xf32, #tpu.memory_space<vmem>>, vector<1x32x96xf32>
    %209 = vector.shape_cast %208 : vector<1x32x96xf32> to vector<32x96xf32>
    %c1_50 = arith.constant 1 : index
    %c0_51 = arith.constant 0 : index
    %c0_52 = arith.constant 0 : index
    %210 = vector.load %arg5[%c1_50, %c0_51, %c0_52] : memref<2x1x96xf32, #tpu.memory_space<vmem>>, vector<1x1x96xf32>
    %211 = vector.shape_cast %210 : vector<1x1x96xf32> to vector<1x96xf32>
    %212 = vector.shape_cast %211 : vector<1x96xf32> to vector<1x96xf32>
    %213 = vector.broadcast %212 : vector<1x96xf32> to vector<8x96xf32>
    %c1_53 = arith.constant 1 : index
    %c0_54 = arith.constant 0 : index
    %c0_55 = arith.constant 0 : index
    %214 = vector.load %arg1[%c1_53, %c0_54, %c0_55] : memref<2x8x32xf32, #tpu.memory_space<vmem>>, vector<1x8x32xf32>
    %215 = vector.shape_cast %214 : vector<1x8x32xf32> to vector<8x32xf32>
    %cst_56 = arith.constant dense<0.000000e+00> : vector<8x96xf32>
    %216 = tpu.matmul %37, %209, %cst_56 {dimension_numbers = #tpu.dot_dimension_numbers<[1], [0], [0], [1], [0, 0, 1, 1], [], []>} : vector<8x32xf32>, vector<32x96xf32>, vector<8x96xf32> -> vector<8x96xf32>
    %217 = arith.addf %216, %213 : vector<8x96xf32>
    %cst_57 = arith.constant dense<0.000000e+00> : vector<8x96xf32>
    %218 = tpu.matmul %215, %203, %cst_57 {dimension_numbers = #tpu.dot_dimension_numbers<[1], [0], [0], [1], [0, 0, 1, 1], [], []>} : vector<8x32xf32>, vector<32x96xf32>, vector<8x96xf32> -> vector<8x96xf32>
    %219 = vector.extract_strided_slice %217 {offsets = [0, 0], sizes = [8, 64], strides = [1, 1]} : vector<8x96xf32> to vector<8x64xf32>
    %220 = vector.extract_strided_slice %218 {offsets = [0, 0], sizes = [8, 64], strides = [1, 1]} : vector<8x96xf32> to vector<8x64xf32>
    %221 = arith.addf %219, %220 : vector<8x64xf32>
    %222 = arith.negf %221 : vector<8x64xf32>
    %223 = math.exp %222 : vector<8x64xf32>
    %cst_58 = arith.constant 1.000000e+00 : f32
    %224 = vector.broadcast %cst_58 : f32 to vector<8x64xf32>
    %225 = arith.addf %224, %223 : vector<8x64xf32>
    %226 = arith.divf %224, %225 : vector<8x64xf32>
    %227 = vector.extract_strided_slice %226 {offsets = [0, 0], sizes = [8, 32], strides = [1, 1]} : vector<8x64xf32> to vector<8x32xf32>
    %228 = vector.extract_strided_slice %226 {offsets = [0, 32], sizes = [8, 32], strides = [1, 1]} : vector<8x64xf32> to vector<8x32xf32>
    %229 = vector.extract_strided_slice %217 {offsets = [0, 64], sizes = [8, 32], strides = [1, 1]} : vector<8x96xf32> to vector<8x32xf32>
    %230 = vector.extract_strided_slice %218 {offsets = [0, 64], sizes = [8, 32], strides = [1, 1]} : vector<8x96xf32> to vector<8x32xf32>
    %231 = arith.addf %230, %207 : vector<8x32xf32>
    %232 = arith.mulf %227, %231 : vector<8x32xf32>
    %233 = arith.addf %229, %232 : vector<8x32xf32>
    %234 = math.tanh %233 : vector<8x32xf32>
    %cst_59 = arith.constant 1.000000e+00 : f32
    %235 = vector.broadcast %cst_59 : f32 to vector<8x32xf32>
    %236 = arith.subf %235, %228 : vector<8x32xf32>
    %237 = arith.mulf %236, %234 : vector<8x32xf32>
    %238 = arith.mulf %228, %215 : vector<8x32xf32>
    %239 = arith.addf %237, %238 : vector<8x32xf32>
    %c0_60 = arith.constant 0 : index
    %c0_61 = arith.constant 0 : index
    %240 = vector.load %arg11[%c0_60, %c0_61] : memref<64x32xf32, #tpu.memory_space<vmem>>, vector<8x32xf32>
    tpu.vector_store %arg11[%c0_60, %c0_61], %239 {strides = array<i32>} : memref<64x32xf32, #tpu.memory_space<vmem>>, vector<8x32xf32>,
    %cst_62 = arith.constant dense<0.000000e+00> : vector<8x96xf32>
    %241 = tpu.matmul %60, %209, %cst_62 {dimension_numbers = #tpu.dot_dimension_numbers<[1], [0], [0], [1], [0, 0, 1, 1], [], []>} : vector<8x32xf32>, vector<32x96xf32>, vector<8x96xf32> -> vector<8x96xf32>
    %242 = arith.addf %241, %213 : vector<8x96xf32>
    %cst_63 = arith.constant dense<0.000000e+00> : vector<8x96xf32>
    %243 = tpu.matmul %239, %203, %cst_63 {dimension_numbers = #tpu.dot_dimension_numbers<[1], [0], [0], [1], [0, 0, 1, 1], [], []>} : vector<8x32xf32>, vector<32x96xf32>, vector<8x96xf32> -> vector<8x96xf32>
    %244 = vector.extract_strided_slice %242 {offsets = [0, 0], sizes = [8, 64], strides = [1, 1]} : vector<8x96xf32> to vector<8x64xf32>
    %245 = vector.extract_strided_slice %243 {offsets = [0, 0], sizes = [8, 64], strides = [1, 1]} : vector<8x96xf32> to vector<8x64xf32>
    %246 = arith.addf %244, %245 : vector<8x64xf32>
    %247 = arith.negf %246 : vector<8x64xf32>
    %248 = math.exp %247 : vector<8x64xf32>
    %cst_64 = arith.constant 1.000000e+00 : f32
    %249 = vector.broadcast %cst_64 : f32 to vector<8x64xf32>
    %250 = arith.addf %249, %248 : vector<8x64xf32>
    %251 = arith.divf %249, %250 : vector<8x64xf32>
    %252 = vector.extract_strided_slice %251 {offsets = [0, 0], sizes = [8, 32], strides = [1, 1]} : vector<8x64xf32> to vector<8x32xf32>
    %253 = vector.extract_strided_slice %251 {offsets = [0, 32], sizes = [8, 32], strides = [1, 1]} : vector<8x64xf32> to vector<8x32xf32>
    %254 = vector.extract_strided_slice %242 {offsets = [0, 64], sizes = [8, 32], strides = [1, 1]} : vector<8x96xf32> to vector<8x32xf32>
    %255 = vector.extract_strided_slice %243 {offsets = [0, 64], sizes = [8, 32], strides = [1, 1]} : vector<8x96xf32> to vector<8x32xf32>
    %256 = arith.addf %255, %207 : vector<8x32xf32>
    %257 = arith.mulf %252, %256 : vector<8x32xf32>
    %258 = arith.addf %254, %257 : vector<8x32xf32>
    %259 = math.tanh %258 : vector<8x32xf32>
    %cst_65 = arith.constant 1.000000e+00 : f32
    %260 = vector.broadcast %cst_65 : f32 to vector<8x32xf32>
    %261 = arith.subf %260, %253 : vector<8x32xf32>
    %262 = arith.mulf %261, %259 : vector<8x32xf32>
    %263 = arith.mulf %253, %239 : vector<8x32xf32>
    %264 = arith.addf %262, %263 : vector<8x32xf32>
    %c8 = arith.constant 8 : index
    %c0_66 = arith.constant 0 : index
    %265 = vector.load %arg11[%c8, %c0_66] : memref<64x32xf32, #tpu.memory_space<vmem>>, vector<8x32xf32>
    tpu.vector_store %arg11[%c8, %c0_66], %264 {strides = array<i32>} : memref<64x32xf32, #tpu.memory_space<vmem>>, vector<8x32xf32>,
    %cst_67 = arith.constant dense<0.000000e+00> : vector<8x96xf32>
    %266 = tpu.matmul %83, %209, %cst_67 {dimension_numbers = #tpu.dot_dimension_numbers<[1], [0], [0], [1], [0, 0, 1, 1], [], []>} : vector<8x32xf32>, vector<32x96xf32>, vector<8x96xf32> -> vector<8x96xf32>
    %267 = arith.addf %266, %213 : vector<8x96xf32>
    %cst_68 = arith.constant dense<0.000000e+00> : vector<8x96xf32>
    %268 = tpu.matmul %264, %203, %cst_68 {dimension_numbers = #tpu.dot_dimension_numbers<[1], [0], [0], [1], [0, 0, 1, 1], [], []>} : vector<8x32xf32>, vector<32x96xf32>, vector<8x96xf32> -> vector<8x96xf32>
    %269 = vector.extract_strided_slice %267 {offsets = [0, 0], sizes = [8, 64], strides = [1, 1]} : vector<8x96xf32> to vector<8x64xf32>
    %270 = vector.extract_strided_slice %268 {offsets = [0, 0], sizes = [8, 64], strides = [1, 1]} : vector<8x96xf32> to vector<8x64xf32>
    %271 = arith.addf %269, %270 : vector<8x64xf32>
    %272 = arith.negf %271 : vector<8x64xf32>
    %273 = math.exp %272 : vector<8x64xf32>
    %cst_69 = arith.constant 1.000000e+00 : f32
    %274 = vector.broadcast %cst_69 : f32 to vector<8x64xf32>
    %275 = arith.addf %274, %273 : vector<8x64xf32>
    %276 = arith.divf %274, %275 : vector<8x64xf32>
    %277 = vector.extract_strided_slice %276 {offsets = [0, 0], sizes = [8, 32], strides = [1, 1]} : vector<8x64xf32> to vector<8x32xf32>
    %278 = vector.extract_strided_slice %276 {offsets = [0, 32], sizes = [8, 32], strides = [1, 1]} : vector<8x64xf32> to vector<8x32xf32>
    %279 = vector.extract_strided_slice %267 {offsets = [0, 64], sizes = [8, 32], strides = [1, 1]} : vector<8x96xf32> to vector<8x32xf32>
    %280 = vector.extract_strided_slice %268 {offsets = [0, 64], sizes = [8, 32], strides = [1, 1]} : vector<8x96xf32> to vector<8x32xf32>
    %281 = arith.addf %280, %207 : vector<8x32xf32>
    %282 = arith.mulf %277, %281 : vector<8x32xf32>
    %283 = arith.addf %279, %282 : vector<8x32xf32>
    %284 = math.tanh %283 : vector<8x32xf32>
    %cst_70 = arith.constant 1.000000e+00 : f32
    %285 = vector.broadcast %cst_70 : f32 to vector<8x32xf32>
    %286 = arith.subf %285, %278 : vector<8x32xf32>
    %287 = arith.mulf %286, %284 : vector<8x32xf32>
    %288 = arith.mulf %278, %264 : vector<8x32xf32>
    %289 = arith.addf %287, %288 : vector<8x32xf32>
    %c16 = arith.constant 16 : index
    %c0_71 = arith.constant 0 : index
    %290 = vector.load %arg11[%c16, %c0_71] : memref<64x32xf32, #tpu.memory_space<vmem>>, vector<8x32xf32>
    tpu.vector_store %arg11[%c16, %c0_71], %289 {strides = array<i32>} : memref<64x32xf32, #tpu.memory_space<vmem>>, vector<8x32xf32>,
    %cst_72 = arith.constant dense<0.000000e+00> : vector<8x96xf32>
    %291 = tpu.matmul %106, %209, %cst_72 {dimension_numbers = #tpu.dot_dimension_numbers<[1], [0], [0], [1], [0, 0, 1, 1], [], []>} : vector<8x32xf32>, vector<32x96xf32>, vector<8x96xf32> -> vector<8x96xf32>
    %292 = arith.addf %291, %213 : vector<8x96xf32>
    %cst_73 = arith.constant dense<0.000000e+00> : vector<8x96xf32>
    %293 = tpu.matmul %289, %203, %cst_73 {dimension_numbers = #tpu.dot_dimension_numbers<[1], [0], [0], [1], [0, 0, 1, 1], [], []>} : vector<8x32xf32>, vector<32x96xf32>, vector<8x96xf32> -> vector<8x96xf32>
    %294 = vector.extract_strided_slice %292 {offsets = [0, 0], sizes = [8, 64], strides = [1, 1]} : vector<8x96xf32> to vector<8x64xf32>
    %295 = vector.extract_strided_slice %293 {offsets = [0, 0], sizes = [8, 64], strides = [1, 1]} : vector<8x96xf32> to vector<8x64xf32>
    %296 = arith.addf %294, %295 : vector<8x64xf32>
    %297 = arith.negf %296 : vector<8x64xf32>
    %298 = math.exp %297 : vector<8x64xf32>
    %cst_74 = arith.constant 1.000000e+00 : f32
    %299 = vector.broadcast %cst_74 : f32 to vector<8x64xf32>
    %300 = arith.addf %299, %298 : vector<8x64xf32>
    %301 = arith.divf %299, %300 : vector<8x64xf32>
    %302 = vector.extract_strided_slice %301 {offsets = [0, 0], sizes = [8, 32], strides = [1, 1]} : vector<8x64xf32> to vector<8x32xf32>
    %303 = vector.extract_strided_slice %301 {offsets = [0, 32], sizes = [8, 32], strides = [1, 1]} : vector<8x64xf32> to vector<8x32xf32>
    %304 = vector.extract_strided_slice %292 {offsets = [0, 64], sizes = [8, 32], strides = [1, 1]} : vector<8x96xf32> to vector<8x32xf32>
    %305 = vector.extract_strided_slice %293 {offsets = [0, 64], sizes = [8, 32], strides = [1, 1]} : vector<8x96xf32> to vector<8x32xf32>
    %306 = arith.addf %305, %207 : vector<8x32xf32>
    %307 = arith.mulf %302, %306 : vector<8x32xf32>
    %308 = arith.addf %304, %307 : vector<8x32xf32>
    %309 = math.tanh %308 : vector<8x32xf32>
    %cst_75 = arith.constant 1.000000e+00 : f32
    %310 = vector.broadcast %cst_75 : f32 to vector<8x32xf32>
    %311 = arith.subf %310, %303 : vector<8x32xf32>
    %312 = arith.mulf %311, %309 : vector<8x32xf32>
    %313 = arith.mulf %303, %289 : vector<8x32xf32>
    %314 = arith.addf %312, %313 : vector<8x32xf32>
    %c24 = arith.constant 24 : index
    %c0_76 = arith.constant 0 : index
    %315 = vector.load %arg11[%c24, %c0_76] : memref<64x32xf32, #tpu.memory_space<vmem>>, vector<8x32xf32>
    tpu.vector_store %arg11[%c24, %c0_76], %314 {strides = array<i32>} : memref<64x32xf32, #tpu.memory_space<vmem>>, vector<8x32xf32>,
    %cst_77 = arith.constant dense<0.000000e+00> : vector<8x96xf32>
    %316 = tpu.matmul %129, %209, %cst_77 {dimension_numbers = #tpu.dot_dimension_numbers<[1], [0], [0], [1], [0, 0, 1, 1], [], []>} : vector<8x32xf32>, vector<32x96xf32>, vector<8x96xf32> -> vector<8x96xf32>
    %317 = arith.addf %316, %213 : vector<8x96xf32>
    %cst_78 = arith.constant dense<0.000000e+00> : vector<8x96xf32>
    %318 = tpu.matmul %314, %203, %cst_78 {dimension_numbers = #tpu.dot_dimension_numbers<[1], [0], [0], [1], [0, 0, 1, 1], [], []>} : vector<8x32xf32>, vector<32x96xf32>, vector<8x96xf32> -> vector<8x96xf32>
    %319 = vector.extract_strided_slice %317 {offsets = [0, 0], sizes = [8, 64], strides = [1, 1]} : vector<8x96xf32> to vector<8x64xf32>
    %320 = vector.extract_strided_slice %318 {offsets = [0, 0], sizes = [8, 64], strides = [1, 1]} : vector<8x96xf32> to vector<8x64xf32>
    %321 = arith.addf %319, %320 : vector<8x64xf32>
    %322 = arith.negf %321 : vector<8x64xf32>
    %323 = math.exp %322 : vector<8x64xf32>
    %cst_79 = arith.constant 1.000000e+00 : f32
    %324 = vector.broadcast %cst_79 : f32 to vector<8x64xf32>
    %325 = arith.addf %324, %323 : vector<8x64xf32>
    %326 = arith.divf %324, %325 : vector<8x64xf32>
    %327 = vector.extract_strided_slice %326 {offsets = [0, 0], sizes = [8, 32], strides = [1, 1]} : vector<8x64xf32> to vector<8x32xf32>
    %328 = vector.extract_strided_slice %326 {offsets = [0, 32], sizes = [8, 32], strides = [1, 1]} : vector<8x64xf32> to vector<8x32xf32>
    %329 = vector.extract_strided_slice %317 {offsets = [0, 64], sizes = [8, 32], strides = [1, 1]} : vector<8x96xf32> to vector<8x32xf32>
    %330 = vector.extract_strided_slice %318 {offsets = [0, 64], sizes = [8, 32], strides = [1, 1]} : vector<8x96xf32> to vector<8x32xf32>
    %331 = arith.addf %330, %207 : vector<8x32xf32>
    %332 = arith.mulf %327, %331 : vector<8x32xf32>
    %333 = arith.addf %329, %332 : vector<8x32xf32>
    %334 = math.tanh %333 : vector<8x32xf32>
    %cst_80 = arith.constant 1.000000e+00 : f32
    %335 = vector.broadcast %cst_80 : f32 to vector<8x32xf32>
    %336 = arith.subf %335, %328 : vector<8x32xf32>
    %337 = arith.mulf %336, %334 : vector<8x32xf32>
    %338 = arith.mulf %328, %314 : vector<8x32xf32>
    %339 = arith.addf %337, %338 : vector<8x32xf32>
    %c32 = arith.constant 32 : index
    %c0_81 = arith.constant 0 : index
    %340 = vector.load %arg11[%c32, %c0_81] : memref<64x32xf32, #tpu.memory_space<vmem>>, vector<8x32xf32>
    tpu.vector_store %arg11[%c32, %c0_81], %339 {strides = array<i32>} : memref<64x32xf32, #tpu.memory_space<vmem>>, vector<8x32xf32>,
    %cst_82 = arith.constant dense<0.000000e+00> : vector<8x96xf32>
    %341 = tpu.matmul %152, %209, %cst_82 {dimension_numbers = #tpu.dot_dimension_numbers<[1], [0], [0], [1], [0, 0, 1, 1], [], []>} : vector<8x32xf32>, vector<32x96xf32>, vector<8x96xf32> -> vector<8x96xf32>
    %342 = arith.addf %341, %213 : vector<8x96xf32>
    %cst_83 = arith.constant dense<0.000000e+00> : vector<8x96xf32>
    %343 = tpu.matmul %339, %203, %cst_83 {dimension_numbers = #tpu.dot_dimension_numbers<[1], [0], [0], [1], [0, 0, 1, 1], [], []>} : vector<8x32xf32>, vector<32x96xf32>, vector<8x96xf32> -> vector<8x96xf32>
    %344 = vector.extract_strided_slice %342 {offsets = [0, 0], sizes = [8, 64], strides = [1, 1]} : vector<8x96xf32> to vector<8x64xf32>
    %345 = vector.extract_strided_slice %343 {offsets = [0, 0], sizes = [8, 64], strides = [1, 1]} : vector<8x96xf32> to vector<8x64xf32>
    %346 = arith.addf %344, %345 : vector<8x64xf32>
    %347 = arith.negf %346 : vector<8x64xf32>
    %348 = math.exp %347 : vector<8x64xf32>
    %cst_84 = arith.constant 1.000000e+00 : f32
    %349 = vector.broadcast %cst_84 : f32 to vector<8x64xf32>
    %350 = arith.addf %349, %348 : vector<8x64xf32>
    %351 = arith.divf %349, %350 : vector<8x64xf32>
    %352 = vector.extract_strided_slice %351 {offsets = [0, 0], sizes = [8, 32], strides = [1, 1]} : vector<8x64xf32> to vector<8x32xf32>
    %353 = vector.extract_strided_slice %351 {offsets = [0, 32], sizes = [8, 32], strides = [1, 1]} : vector<8x64xf32> to vector<8x32xf32>
    %354 = vector.extract_strided_slice %342 {offsets = [0, 64], sizes = [8, 32], strides = [1, 1]} : vector<8x96xf32> to vector<8x32xf32>
    %355 = vector.extract_strided_slice %343 {offsets = [0, 64], sizes = [8, 32], strides = [1, 1]} : vector<8x96xf32> to vector<8x32xf32>
    %356 = arith.addf %355, %207 : vector<8x32xf32>
    %357 = arith.mulf %352, %356 : vector<8x32xf32>
    %358 = arith.addf %354, %357 : vector<8x32xf32>
    %359 = math.tanh %358 : vector<8x32xf32>
    %cst_85 = arith.constant 1.000000e+00 : f32
    %360 = vector.broadcast %cst_85 : f32 to vector<8x32xf32>
    %361 = arith.subf %360, %353 : vector<8x32xf32>
    %362 = arith.mulf %361, %359 : vector<8x32xf32>
    %363 = arith.mulf %353, %339 : vector<8x32xf32>
    %364 = arith.addf %362, %363 : vector<8x32xf32>
    %c40 = arith.constant 40 : index
    %c0_86 = arith.constant 0 : index
    %365 = vector.load %arg11[%c40, %c0_86] : memref<64x32xf32, #tpu.memory_space<vmem>>, vector<8x32xf32>
    tpu.vector_store %arg11[%c40, %c0_86], %364 {strides = array<i32>} : memref<64x32xf32, #tpu.memory_space<vmem>>, vector<8x32xf32>,
    %cst_87 = arith.constant dense<0.000000e+00> : vector<8x96xf32>
    %366 = tpu.matmul %175, %209, %cst_87 {dimension_numbers = #tpu.dot_dimension_numbers<[1], [0], [0], [1], [0, 0, 1, 1], [], []>} : vector<8x32xf32>, vector<32x96xf32>, vector<8x96xf32> -> vector<8x96xf32>
    %367 = arith.addf %366, %213 : vector<8x96xf32>
    %cst_88 = arith.constant dense<0.000000e+00> : vector<8x96xf32>
    %368 = tpu.matmul %364, %203, %cst_88 {dimension_numbers = #tpu.dot_dimension_numbers<[1], [0], [0], [1], [0, 0, 1, 1], [], []>} : vector<8x32xf32>, vector<32x96xf32>, vector<8x96xf32> -> vector<8x96xf32>
    %369 = vector.extract_strided_slice %367 {offsets = [0, 0], sizes = [8, 64], strides = [1, 1]} : vector<8x96xf32> to vector<8x64xf32>
    %370 = vector.extract_strided_slice %368 {offsets = [0, 0], sizes = [8, 64], strides = [1, 1]} : vector<8x96xf32> to vector<8x64xf32>
    %371 = arith.addf %369, %370 : vector<8x64xf32>
    %372 = arith.negf %371 : vector<8x64xf32>
    %373 = math.exp %372 : vector<8x64xf32>
    %cst_89 = arith.constant 1.000000e+00 : f32
    %374 = vector.broadcast %cst_89 : f32 to vector<8x64xf32>
    %375 = arith.addf %374, %373 : vector<8x64xf32>
    %376 = arith.divf %374, %375 : vector<8x64xf32>
    %377 = vector.extract_strided_slice %376 {offsets = [0, 0], sizes = [8, 32], strides = [1, 1]} : vector<8x64xf32> to vector<8x32xf32>
    %378 = vector.extract_strided_slice %376 {offsets = [0, 32], sizes = [8, 32], strides = [1, 1]} : vector<8x64xf32> to vector<8x32xf32>
    %379 = vector.extract_strided_slice %367 {offsets = [0, 64], sizes = [8, 32], strides = [1, 1]} : vector<8x96xf32> to vector<8x32xf32>
    %380 = vector.extract_strided_slice %368 {offsets = [0, 64], sizes = [8, 32], strides = [1, 1]} : vector<8x96xf32> to vector<8x32xf32>
    %381 = arith.addf %380, %207 : vector<8x32xf32>
    %382 = arith.mulf %377, %381 : vector<8x32xf32>
    %383 = arith.addf %379, %382 : vector<8x32xf32>
    %384 = math.tanh %383 : vector<8x32xf32>
    %cst_90 = arith.constant 1.000000e+00 : f32
    %385 = vector.broadcast %cst_90 : f32 to vector<8x32xf32>
    %386 = arith.subf %385, %378 : vector<8x32xf32>
    %387 = arith.mulf %386, %384 : vector<8x32xf32>
    %388 = arith.mulf %378, %364 : vector<8x32xf32>
    %389 = arith.addf %387, %388 : vector<8x32xf32>
    %c48 = arith.constant 48 : index
    %c0_91 = arith.constant 0 : index
    %390 = vector.load %arg11[%c48, %c0_91] : memref<64x32xf32, #tpu.memory_space<vmem>>, vector<8x32xf32>
    tpu.vector_store %arg11[%c48, %c0_91], %389 {strides = array<i32>} : memref<64x32xf32, #tpu.memory_space<vmem>>, vector<8x32xf32>,
    %cst_92 = arith.constant dense<0.000000e+00> : vector<8x96xf32>
    %391 = tpu.matmul %198, %209, %cst_92 {dimension_numbers = #tpu.dot_dimension_numbers<[1], [0], [0], [1], [0, 0, 1, 1], [], []>} : vector<8x32xf32>, vector<32x96xf32>, vector<8x96xf32> -> vector<8x96xf32>
    %392 = arith.addf %391, %213 : vector<8x96xf32>
    %cst_93 = arith.constant dense<0.000000e+00> : vector<8x96xf32>
    %393 = tpu.matmul %389, %203, %cst_93 {dimension_numbers = #tpu.dot_dimension_numbers<[1], [0], [0], [1], [0, 0, 1, 1], [], []>} : vector<8x32xf32>, vector<32x96xf32>, vector<8x96xf32> -> vector<8x96xf32>
    %394 = vector.extract_strided_slice %392 {offsets = [0, 0], sizes = [8, 64], strides = [1, 1]} : vector<8x96xf32> to vector<8x64xf32>
    %395 = vector.extract_strided_slice %393 {offsets = [0, 0], sizes = [8, 64], strides = [1, 1]} : vector<8x96xf32> to vector<8x64xf32>
    %396 = arith.addf %394, %395 : vector<8x64xf32>
    %397 = arith.negf %396 : vector<8x64xf32>
    %398 = math.exp %397 : vector<8x64xf32>
    %cst_94 = arith.constant 1.000000e+00 : f32
    %399 = vector.broadcast %cst_94 : f32 to vector<8x64xf32>
    %400 = arith.addf %399, %398 : vector<8x64xf32>
    %401 = arith.divf %399, %400 : vector<8x64xf32>
    %402 = vector.extract_strided_slice %401 {offsets = [0, 0], sizes = [8, 32], strides = [1, 1]} : vector<8x64xf32> to vector<8x32xf32>
    %403 = vector.extract_strided_slice %401 {offsets = [0, 32], sizes = [8, 32], strides = [1, 1]} : vector<8x64xf32> to vector<8x32xf32>
    %404 = vector.extract_strided_slice %392 {offsets = [0, 64], sizes = [8, 32], strides = [1, 1]} : vector<8x96xf32> to vector<8x32xf32>
    %405 = vector.extract_strided_slice %393 {offsets = [0, 64], sizes = [8, 32], strides = [1, 1]} : vector<8x96xf32> to vector<8x32xf32>
    %406 = arith.addf %405, %207 : vector<8x32xf32>
    %407 = arith.mulf %402, %406 : vector<8x32xf32>
    %408 = arith.addf %404, %407 : vector<8x32xf32>
    %409 = math.tanh %408 : vector<8x32xf32>
    %cst_95 = arith.constant 1.000000e+00 : f32
    %410 = vector.broadcast %cst_95 : f32 to vector<8x32xf32>
    %411 = arith.subf %410, %403 : vector<8x32xf32>
    %412 = arith.mulf %411, %409 : vector<8x32xf32>
    %413 = arith.mulf %403, %389 : vector<8x32xf32>
    %414 = arith.addf %412, %413 : vector<8x32xf32>
    %c56 = arith.constant 56 : index
    %c0_96 = arith.constant 0 : index
    %415 = vector.load %arg11[%c56, %c0_96] : memref<64x32xf32, #tpu.memory_space<vmem>>, vector<8x32xf32>
    tpu.vector_store %arg11[%c56, %c0_96], %414 {strides = array<i32>} : memref<64x32xf32, #tpu.memory_space<vmem>>, vector<8x32xf32>,
    %c1_97 = arith.constant 1 : index
    %c0_98 = arith.constant 0 : index
    %c0_99 = arith.constant 0 : index
    %416 = vector.load %arg10[%c1_97, %c0_98, %c0_99] : memref<2x8x32xf32, #tpu.memory_space<vmem>>, vector<1x8x32xf32>
    %417 = vector.shape_cast %416 : vector<1x8x32xf32> to vector<8x32xf32>
    %418 = vector.shape_cast %414 : vector<8x32xf32> to vector<1x8x32xf32>
    tpu.vector_store %arg10[%c1_97, %c0_98, %c0_99], %418 {strides = array<i32>} : memref<2x8x32xf32, #tpu.memory_space<vmem>>, vector<1x8x32xf32>,
    %c0_100 = arith.constant 0 : index
    %c0_101 = arith.constant 0 : index
    %419 = vector.load %arg11[%c0_100, %c0_101] : memref<64x32xf32, #tpu.memory_space<vmem>>, vector<64x32xf32>
    %c0_102 = arith.constant 0 : index
    %c0_103 = arith.constant 0 : index
    %420 = vector.load %arg7[%c0_102, %c0_103] : memref<32x16xf32, #tpu.memory_space<vmem>>, vector<32x16xf32>
    %cst_104 = arith.constant dense<0.000000e+00> : vector<64x16xf32>
    %421 = tpu.matmul %419, %420, %cst_104 {dimension_numbers = #tpu.dot_dimension_numbers<[1], [0], [0], [1], [0, 0, 1, 1], [], []>, precision = #tpu.contract_precision<fp32>} : vector<64x32xf32>, vector<32x16xf32>, vector<64x16xf32> -> vector<64x16xf32>
    %c0_105 = arith.constant 0 : index
    %c0_106 = arith.constant 0 : index
    %422 = vector.load %arg8[%c0_105, %c0_106] : memref<1x16xf32, #tpu.memory_space<vmem>>, vector<1x16xf32>
    %423 = vector.broadcast %422 : vector<1x16xf32> to vector<64x16xf32>
    %424 = arith.addf %421, %423 : vector<64x16xf32>
    %c0_107 = arith.constant 0 : index
    %c0_108 = arith.constant 0 : index
    %425 = vector.load %arg9[%c0_107, %c0_108] : memref<64x16xf32, #tpu.memory_space<vmem>>, vector<64x16xf32>
    tpu.vector_store %arg9[%c0_107, %c0_108], %424 {strides = array<i32>} : memref<64x16xf32, #tpu.memory_space<vmem>>, vector<64x16xf32>,
    return
  }
}

</mosaic_0001>

<llo_original>
// kernel: _lambda_.1
$region0: #{_lambda_.1}
  #allocation0 [shape = 'u32[]', space=smem, size = 0x4, offset = 0x4, fixed_abs, tag = 'smem constant byte address 0x4 - core index']
  #allocation1 [shape = 'u32[72,128]{1,0:T(1,128)}', space=vmem, size = 0x9000, scoped, tag = 'internal scratch']
  #allocation2 [shape = 'f32[64,32]{1,0:T(8,128)}', space=vmem, size = 0x8000, scoped, tag = 'scratch operand']
  %s0 = inlined_call_operand.vmem [shape: f32[64,16], index: 0, kind: input, shape index: {}]
  %s1 = inlined_call_operand.vmem [shape: f32[2,8,32], index: 1, kind: input, shape index: {}]
  %s2 = inlined_call_operand.hbm [shape: f32[16,96], index: 2, kind: input, shape index: {}]
  %s3 = inlined_call_operand.vmem [shape: f32[1,32,96], index: 3, kind: input, shape index: {}]
  %s4 = inlined_call_operand.vmem [shape: f32[2,32,96], index: 4, kind: input, shape index: {}]
  %s5 = inlined_call_operand.vmem [shape: f32[2,1,96], index: 5, kind: input, shape index: {}]
  %s6 = inlined_call_operand.vmem [shape: f32[2,1,32], index: 6, kind: input, shape index: {}]
  %s7 = inlined_call_operand.vmem [shape: f32[32,16], index: 7, kind: input, shape index: {}]
  %s8 = inlined_call_operand.hbm [shape: f32[1,16], index: 8, kind: input, shape index: {}]
  %s9 = inlined_call_operand.vmem [shape: f32[64,16], index: 9, kind: output, shape index: {0}]
  %s10 = inlined_call_operand.vmem [shape: f32[2,8,32], index: 10, kind: output, shape index: {1}]
  %11 = xla_tuple %s9, %s10
  %s12 = sld [smem:[#allocation0]]
  $region62: #{_lambda_.1} parent=0
    _
  %s14 = ssub.s32 1, %s12
  %s15 = scalar_select 0, %s14, %s12
  $region1: #{_lambda_.1} parent=0
    #allocation3 [shape = 'u8[8192]{0}', space=vmem, size = 0x2000, scoped, tag = 'input window, operand 2, single buffered']
    #allocation4 [shape = 's32[1]{0}', space=sflag, size = 0x4, scoped, tag = 'scoped memory for _lambda_.1']
    #allocation5 [shape = 'u8[512]{0}', space=vmem, size = 0x400, scoped, tag = 'input window, operand 8, single buffered']
    #allocation6 [shape = 's32[1]{0}', space=sflag, size = 0x4, scoped, tag = 'scoped memory for _lambda_.1']
    %16 = vsyncpa [#allocation4], 0
    %17 = vsyncpa [#allocation6], 0
    // Predicated region
    $region2: #{_lambda_.1} parent=1 // pred_check
      _
    $region3: #{_lambda_.1} parent=1 // pred_check_branch
      %19 = sbr.rel (0) target = $region5
    $region4: #{_lambda_.1} parent=1 // pred_region
      _
    $region5: #{_lambda_.1} parent=1 // pred_fallthru
      _
    // Predicated region
    $region6: #{_lambda_.1} parent=1 // pred_check
      _
    $region7: #{_lambda_.1} parent=1 // pred_check_branch
      %21 = sbr.rel (0) target = $region9
    $region8: #{_lambda_.1} parent=1 // pred_region
      _
    $region9: #{_lambda_.1} parent=1 // pred_fallthru
      _
    // Predicated region
    $region10: #{_lambda_.1} parent=1 // pred_check
      _
    $region11: #{_lambda_.1} parent=1 // pred_check_branch
      %23 = sbr.rel (0) target = $region13
    $region12: #{_lambda_.1} parent=1 // pred_region
      %25 = vsyncadd [#allocation4], 0
      %s26 = sshll.u32 %s2, 4
      %s27 = int_to_ptr.hbm [resolvable:$true] %s26
      %s28 = sshll.u32 [#allocation3], 4
      %s29 = int_to_ptr.vmem [resolvable:$true] %s28
      %34 = dma.hbm_to_vmem [thread:$0]  %s27, 256, %s29, [#allocation4], 128, 128, 8
    $region13: #{_lambda_.1} parent=1 // pred_fallthru
      _
    // Predicated region
    $region14: #{_lambda_.1} parent=1 // pred_check
      _
    $region15: #{_lambda_.1} parent=1 // pred_check_branch
      %36 = sbr.rel (0) target = $region17
    $region16: #{_lambda_.1} parent=1 // pred_region
      _
    $region17: #{_lambda_.1} parent=1 // pred_fallthru
      _
    // Predicated region
    $region18: #{_lambda_.1} parent=1 // pred_check
      _
    $region19: #{_lambda_.1} parent=1 // pred_check_branch
      %38 = sbr.rel (0) target = $region21
    $region20: #{_lambda_.1} parent=1 // pred_region
      _
    $region21: #{_lambda_.1} parent=1 // pred_fallthru
      _
    // Predicated region
    $region22: #{_lambda_.1} parent=1 // pred_check
      _
    $region23: #{_lambda_.1} parent=1 // pred_check_branch
      %40 = sbr.rel (0) target = $region25
    $region24: #{_lambda_.1} parent=1 // pred_region
      _
    $region25: #{_lambda_.1} parent=1 // pred_fallthru
      _
    // Predicated region
    $region26: #{_lambda_.1} parent=1 // pred_check
      _
    $region27: #{_lambda_.1} parent=1 // pred_check_branch
      %42 = sbr.rel (0) target = $region29
    $region28: #{_lambda_.1} parent=1 // pred_region
      _
    $region29: #{_lambda_.1} parent=1 // pred_fallthru
      _
    // Predicated region
    $region30: #{_lambda_.1} parent=1 // pred_check
      _
    $region31: #{_lambda_.1} parent=1 // pred_check_branch
      %44 = sbr.rel (0) target = $region33
    $region32: #{_lambda_.1} parent=1 // pred_region
      _
    $region33: #{_lambda_.1} parent=1 // pred_fallthru
      _
    // Predicated region
    $region34: #{_lambda_.1} parent=1 // pred_check
      _
    $region35: #{_lambda_.1} parent=1 // pred_check_branch
      %46 = sbr.rel (0) target = $region37
    $region36: #{_lambda_.1} parent=1 // pred_region
      %48 = vsyncadd [#allocation6], 0
      %s50 = sshll.u32 %s8, 4
      %s51 = int_to_ptr.hbm [resolvable:$true] %s50
      %s52 = sshll.u32 [#allocation5], 4
      %s53 = int_to_ptr.vmem [resolvable:$true] %s52
      %55 = dma.hbm_to_vmem [thread:$0]  %s51, 16, %s53, [#allocation6]
    $region37: #{_lambda_.1} parent=1 // pred_fallthru
      _
    // Predicated region
    $region38: #{_lambda_.1} parent=1 // pred_check
      _
    $region39: #{_lambda_.1} parent=1 // pred_check_branch
      %57 = sbr.rel (0) target = $region41
    $region40: #{_lambda_.1} parent=1 // pred_region
      %59 = dma.done [#allocation4], 256
    $region41: #{_lambda_.1} parent=1 // pred_fallthru
      _
    // Predicated region
    $region42: #{_lambda_.1} parent=1 // pred_check
      _
    $region43: #{_lambda_.1} parent=1 // pred_check_branch
      %61 = sbr.rel (0) target = $region45
    $region44: #{_lambda_.1} parent=1 // pred_region
      %63 = dma.done [#allocation6], 16
    $region45: #{_lambda_.1} parent=1 // pred_fallthru
      _
    %v64 = vld [vmem:[%s0] sm:$0xff]
    %v65 = vld [vmem:[%s0 + $0x8] sm:$0xff]
    %v66 = vld [vmem:[%s0 + $0x10] sm:$0xff]
    %v67 = vld [vmem:[%s0 + $0x18] sm:$0xff]
    %v68 = vld [vmem:[%s0 + $0x20] sm:$0xff]
    %v69 = vld [vmem:[%s0 + $0x28] sm:$0xff]
    %v70 = vld [vmem:[%s0 + $0x30] sm:$0xff]
    %v71 = vld [vmem:[%s0 + $0x38] sm:$0xff]
    %v72 = vld [vmem:[#allocation3] sm:$0xff]
    %v73 = vld [vmem:[#allocation3 + $0x8] sm:$0xff]
    %v74 = vld [vmem:[%s5] sm:$0x1]
    %v76 = vperm.slane %v74, 0
    %vm78 = vcmask 130048
    %v80 = vsel %vm78, %v64, 0
    %v83 = vsel %vm78, %v65, 0
    %v86 = vsel %vm78, %v66, 0
    %v89 = vsel %vm78, %v67, 0
    %v92 = vsel %vm78, %v68, 0
    %v95 = vsel %vm78, %v69, 0
    %v98 = vsel %vm78, %v70, 0
    %v101 = vsel %vm78, %v71, 0
    %103 = vmatpush.msra.mxu0 0.0
    %104 = vmatpush.msra.mxu0 0.0
    %105 = vmatpush.msra.mxu0 0.0
    %106 = vmatpush.msra.mxu0 0.0
    %107 = vmatpush.msra.mxu0 0.0
    %108 = vmatpush.msra.mxu0 0.0
    %109 = vmatpush.msra.mxu0 0.0
    %110 = vmatpush.msra.mxu0 0.0
    %111 = vmatpush.msra.mxu0 0.0
    %112 = vmatpush.msra.mxu0 0.0
    %113 = vmatpush.msra.mxu0 0.0
    %114 = vmatpush.msra.mxu0 0.0
    %115 = vmatpush.msra.mxu0 0.0
    %116 = vmatpush.msra.mxu0 0.0
    %v117 = vand.u32 %v73, 4294901760
    %118 = vmatpush.msra.mxu0 %v117
    %v119 = vand.u32 %v72, 4294901760
    %120 = vmatpush.msra.mxu0 %v119
    %v121 = vand.u32 %v80, 4294901760
    %v122 = vsub.f32 %v80, %v121
    %v123 = vand.u32 %v122, 4294901760
    %v124 = vsub.f32 %v122, %v123
    %v125 = vand.u32 %v124, 4294901760
    %126 = vmatmul.f32.gmra.mxu0 %v125
    %v127 = vpop.f32.mrf.mxu0
    %v128 = vadd.f32 %v76, %v127
    %v129 = vand.u32 %v83, 4294901760
    %v130 = vsub.f32 %v83, %v129
    %v131 = vand.u32 %v130, 4294901760
    %v132 = vsub.f32 %v130, %v131
    %v133 = vand.u32 %v132, 4294901760
    %134 = vmatmul.f32.gmra.mxu0 %v133
    %v135 = vpop.f32.mrf.mxu0
    %v136 = vadd.f32 %v76, %v135
    %v137 = vand.u32 %v86, 4294901760
    %v138 = vsub.f32 %v86, %v137
    %v139 = vand.u32 %v138, 4294901760
    %v140 = vsub.f32 %v138, %v139
    %v141 = vand.u32 %v140, 4294901760
    %142 = vmatmul.f32.gmra.mxu0 %v141
    %v143 = vpop.f32.mrf.mxu0
    %v144 = vadd.f32 %v76, %v143
    %v145 = vand.u32 %v89, 4294901760
    %v146 = vsub.f32 %v89, %v145
    %v147 = vand.u32 %v146, 4294901760
    %v148 = vsub.f32 %v146, %v147
    %v149 = vand.u32 %v148, 4294901760
    %150 = vmatmul.f32.gmra.mxu0 %v149
    %v151 = vpop.f32.mrf.mxu0
    %v152 = vadd.f32 %v76, %v151
    %v153 = vand.u32 %v92, 4294901760
    %v154 = vsub.f32 %v92, %v153
    %v155 = vand.u32 %v154, 4294901760
    %v156 = vsub.f32 %v154, %v155
    %v157 = vand.u32 %v156, 4294901760
    %158 = vmatmul.f32.gmra.mxu0 %v157
    %v159 = vpop.f32.mrf.mxu0
    %v160 = vadd.f32 %v76, %v159
    %v161 = vand.u32 %v95, 4294901760
    %v162 = vsub.f32 %v95, %v161
    %v163 = vand.u32 %v162, 4294901760
    %v164 = vsub.f32 %v162, %v163
    %v165 = vand.u32 %v164, 4294901760
    %166 = vmatmul.f32.gmra.mxu0 %v165
    %v167 = vpop.f32.mrf.mxu0
    %v168 = vadd.f32 %v76, %v167
    %v169 = vand.u32 %v98, 4294901760
    %v170 = vsub.f32 %v98, %v169
    %v171 = vand.u32 %v170, 4294901760
    %v172 = vsub.f32 %v170, %v171
    %v173 = vand.u32 %v172, 4294901760
    %174 = vmatmul.f32.gmra.mxu0 %v173
    %v175 = vpop.f32.mrf.mxu0
    %v176 = vadd.f32 %v76, %v175
    %v177 = vand.u32 %v101, 4294901760
    %v178 = vsub.f32 %v101, %v177
    %v179 = vand.u32 %v178, 4294901760
    %v180 = vsub.f32 %v178, %v179
    %v181 = vand.u32 %v180, 4294901760
    %182 = vmatmul.f32.gmra.mxu0 %v181
    %v183 = vpop.f32.mrf.mxu0
    %v184 = vadd.f32 %v76, %v183
    %185 = vdwg.mxu0
    %186 = vmatpush.msra.mxu0 0.0
    %187 = vmatpush.msra.mxu0 0.0
    %188 = vmatpush.msra.mxu0 0.0
    %189 = vmatpush.msra.mxu0 0.0
    %190 = vmatpush.msra.mxu0 0.0
    %191 = vmatpush.msra.mxu0 0.0
    %192 = vmatpush.msra.mxu0 0.0
    %193 = vmatpush.msra.mxu0 0.0
    %194 = vmatpush.msra.mxu0 0.0
    %195 = vmatpush.msra.mxu0 0.0
    %196 = vmatpush.msra.mxu0 0.0
    %197 = vmatpush.msra.mxu0 0.0
    %198 = vmatpush.msra.mxu0 0.0
    %199 = vmatpush.msra.mxu0 0.0
    %v200 = vand.u32 %v73, 4294901760
    %v201 = vsub.f32 %v73, %v200
    %v202 = vand.u32 %v201, 4294901760
    %v203 = vsub.f32 %v201, %v202
    %v204 = vand.u32 %v203, 4294901760
    %205 = vmatpush.msra.mxu0 %v204
    %v206 = vand.u32 %v72, 4294901760
    %v207 = vsub.f32 %v72, %v206
    %v208 = vand.u32 %v207, 4294901760
    %v209 = vsub.f32 %v207, %v208
    %v210 = vand.u32 %v209, 4294901760
    %211 = vmatpush.msra.mxu0 %v210
    %v212 = vand.u32 %v80, 4294901760
    %213 = vmatmul.f32.gmra.mxu0 %v212
    %v214 = vpop.f32.mrf.mxu0
    %v215 = vadd.f32 %v128, %v214
    %v216 = vand.u32 %v83, 4294901760
    %217 = vmatmul.f32.gmra.mxu0 %v216
    %v218 = vpop.f32.mrf.mxu0
    %v219 = vadd.f32 %v136, %v218
    %v220 = vand.u32 %v86, 4294901760
    %221 = vmatmul.f32.gmra.mxu0 %v220
    %v222 = vpop.f32.mrf.mxu0
    %v223 = vadd.f32 %v144, %v222
    %v224 = vand.u32 %v89, 4294901760
    %225 = vmatmul.f32.gmra.mxu0 %v224
    %v226 = vpop.f32.mrf.mxu0
    %v227 = vadd.f32 %v152, %v226
    %v228 = vand.u32 %v92, 4294901760
    %229 = vmatmul.f32.gmra.mxu0 %v228
    %v230 = vpop.f32.mrf.mxu0
    %v231 = vadd.f32 %v160, %v230
    %v232 = vand.u32 %v95, 4294901760
    %233 = vmatmul.f32.gmra.mxu0 %v232
    %v234 = vpop.f32.mrf.mxu0
    %v235 = vadd.f32 %v168, %v234
    %v236 = vand.u32 %v98, 4294901760
    %237 = vmatmul.f32.gmra.mxu0 %v236
    %v238 = vpop.f32.mrf.mxu0
    %v239 = vadd.f32 %v176, %v238
    %v240 = vand.u32 %v101, 4294901760
    %241 = vmatmul.f32.gmra.mxu0 %v240
    %v242 = vpop.f32.mrf.mxu0
    %v243 = vadd.f32 %v184, %v242
    %244 = vdwg.mxu0
    %245 = vmatpush.msra.mxu0 0.0
    %246 = vmatpush.msra.mxu0 0.0
    %247 = vmatpush.msra.mxu0 0.0
    %248 = vmatpush.msra.mxu0 0.0
    %249 = vmatpush.msra.mxu0 0.0
    %250 = vmatpush.msra.mxu0 0.0
    %251 = vmatpush.msra.mxu0 0.0
    %252 = vmatpush.msra.mxu0 0.0
    %253 = vmatpush.msra.mxu0 0.0
    %254 = vmatpush.msra.mxu0 0.0
    %255 = vmatpush.msra.mxu0 0.0
    %256 = vmatpush.msra.mxu0 0.0
    %257 = vmatpush.msra.mxu0 0.0
    %258 = vmatpush.msra.mxu0 0.0
    %v259 = vand.u32 %v73, 4294901760
    %v260 = vsub.f32 %v73, %v259
    %261 = vmatpush.msra.mxu0 %v260
    %v262 = vand.u32 %v72, 4294901760
    %v263 = vsub.f32 %v72, %v262
    %264 = vmatpush.msra.mxu0 %v263
    %v265 = vand.u32 %v80, 4294901760
    %v266 = vsub.f32 %v80, %v265
    %267 = vmatmul.f32.gmra.mxu0 %v266
    %v268 = vpop.f32.mrf.mxu0
    %v269 = vadd.f32 %v215, %v268
    %v270 = vand.u32 %v83, 4294901760
    %v271 = vsub.f32 %v83, %v270
    %272 = vmatmul.f32.gmra.mxu0 %v271
    %v273 = vpop.f32.mrf.mxu0
    %v274 = vadd.f32 %v219, %v273
    %v275 = vand.u32 %v86, 4294901760
    %v276 = vsub.f32 %v86, %v275
    %277 = vmatmul.f32.gmra.mxu0 %v276
    %v278 = vpop.f32.mrf.mxu0
    %v279 = vadd.f32 %v223, %v278
    %v280 = vand.u32 %v89, 4294901760
    %v281 = vsub.f32 %v89, %v280
    %282 = vmatmul.f32.gmra.mxu0 %v281
    %v283 = vpop.f32.mrf.mxu0
    %v284 = vadd.f32 %v227, %v283
    %v285 = vand.u32 %v92, 4294901760
    %v286 = vsub.f32 %v92, %v285
    %287 = vmatmul.f32.gmra.mxu0 %v286
    %v288 = vpop.f32.mrf.mxu0
    %v289 = vadd.f32 %v231, %v288
    %v290 = vand.u32 %v95, 4294901760
    %v291 = vsub.f32 %v95, %v290
    %292 = vmatmul.f32.gmra.mxu0 %v291
    %v293 = vpop.f32.mrf.mxu0
    %v294 = vadd.f32 %v235, %v293
    %v295 = vand.u32 %v98, 4294901760
    %v296 = vsub.f32 %v98, %v295
    %297 = vmatmul.f32.gmra.mxu0 %v296
    %v298 = vpop.f32.mrf.mxu0
    %v299 = vadd.f32 %v239, %v298
    %v300 = vand.u32 %v101, 4294901760
    %v301 = vsub.f32 %v101, %v300
    %302 = vmatmul.f32.gmra.mxu0 %v301
    %v303 = vpop.f32.mrf.mxu0
    %v304 = vadd.f32 %v243, %v303
    %305 = vdwg.mxu0
    %306 = vmatpush.msra.mxu0 0.0
    %307 = vmatpush.msra.mxu0 0.0
    %308 = vmatpush.msra.mxu0 0.0
    %309 = vmatpush.msra.mxu0 0.0
    %310 = vmatpush.msra.mxu0 0.0
    %311 = vmatpush.msra.mxu0 0.0
    %312 = vmatpush.msra.mxu0 0.0
    %313 = vmatpush.msra.mxu0 0.0
    %314 = vmatpush.msra.mxu0 0.0
    %315 = vmatpush.msra.mxu0 0.0
    %316 = vmatpush.msra.mxu0 0.0
    %317 = vmatpush.msra.mxu0 0.0
    %318 = vmatpush.msra.mxu0 0.0
    %319 = vmatpush.msra.mxu0 0.0
    %v320 = vand.u32 %v73, 4294901760
    %321 = vmatpush.msra.mxu0 %v320
    %v322 = vand.u32 %v72, 4294901760
    %323 = vmatpush.msra.mxu0 %v322
    %v324 = vand.u32 %v80, 4294901760
    %v325 = vsub.f32 %v80, %v324
    %v326 = vand.u32 %v325, 4294901760
    %327 = vmatmul.f32.gmra.mxu0 %v326
    %v328 = vpop.f32.mrf.mxu0
    %v329 = vadd.f32 %v269, %v328
    %v330 = vand.u32 %v83, 4294901760
    %v331 = vsub.f32 %v83, %v330
    %v332 = vand.u32 %v331, 4294901760
    %333 = vmatmul.f32.gmra.mxu0 %v332
    %v334 = vpop.f32.mrf.mxu0
    %v335 = vadd.f32 %v274, %v334
    %v336 = vand.u32 %v86, 4294901760
    %v337 = vsub.f32 %v86, %v336
    %v338 = vand.u32 %v337, 4294901760
    %339 = vmatmul.f32.gmra.mxu0 %v338
    %v340 = vpop.f32.mrf.mxu0
    %v341 = vadd.f32 %v279, %v340
    %v342 = vand.u32 %v89, 4294901760
    %v343 = vsub.f32 %v89, %v342
    %v344 = vand.u32 %v343, 4294901760
    %345 = vmatmul.f32.gmra.mxu0 %v344
    %v346 = vpop.f32.mrf.mxu0
    %v347 = vadd.f32 %v284, %v346
    %v348 = vand.u32 %v92, 4294901760
    %v349 = vsub.f32 %v92, %v348
    %v350 = vand.u32 %v349, 4294901760
    %351 = vmatmul.f32.gmra.mxu0 %v350
    %v352 = vpop.f32.mrf.mxu0
    %v353 = vadd.f32 %v289, %v352
    %v354 = vand.u32 %v95, 4294901760
    %v355 = vsub.f32 %v95, %v354
    %v356 = vand.u32 %v355, 4294901760
    %357 = vmatmul.f32.gmra.mxu0 %v356
    %v358 = vpop.f32.mrf.mxu0
    %v359 = vadd.f32 %v294, %v358
    %v360 = vand.u32 %v98, 4294901760
    %v361 = vsub.f32 %v98, %v360
    %v362 = vand.u32 %v361, 4294901760
    %363 = vmatmul.f32.gmra.mxu0 %v362
    %v364 = vpop.f32.mrf.mxu0
    %v365 = vadd.f32 %v299, %v364
    %v366 = vand.u32 %v101, 4294901760
    %v367 = vsub.f32 %v101, %v366
    %v368 = vand.u32 %v367, 4294901760
    %369 = vmatmul.f32.gmra.mxu0 %v368
    %v370 = vpop.f32.mrf.mxu0
    %v371 = vadd.f32 %v304, %v370
    %372 = vdwg.mxu0
    %373 = vmatpush.msra.mxu0 0.0
    %374 = vmatpush.msra.mxu0 0.0
    %375 = vmatpush.msra.mxu0 0.0
    %376 = vmatpush.msra.mxu0 0.0
    %377 = vmatpush.msra.mxu0 0.0
    %378 = vmatpush.msra.mxu0 0.0
    %379 = vmatpush.msra.mxu0 0.0
    %380 = vmatpush.msra.mxu0 0.0
    %381 = vmatpush.msra.mxu0 0.0
    %382 = vmatpush.msra.mxu0 0.0
    %383 = vmatpush.msra.mxu0 0.0
    %384 = vmatpush.msra.mxu0 0.0
    %385 = vmatpush.msra.mxu0 0.0
    %386 = vmatpush.msra.mxu0 0.0
    %v387 = vand.u32 %v73, 4294901760
    %v388 = vsub.f32 %v73, %v387
    %v389 = vand.u32 %v388, 4294901760
    %390 = vmatpush.msra.mxu0 %v389
    %v391 = vand.u32 %v72, 4294901760
    %v392 = vsub.f32 %v72, %v391
    %v393 = vand.u32 %v392, 4294901760
    %394 = vmatpush.msra.mxu0 %v393
    %v395 = vand.u32 %v80, 4294901760
    %396 = vmatmul.f32.gmra.mxu0 %v395
    %v397 = vpop.f32.mrf.mxu0
    %v398 = vadd.f32 %v329, %v397
    %v399 = vand.u32 %v83, 4294901760
    %400 = vmatmul.f32.gmra.mxu0 %v399
    %v401 = vpop.f32.mrf.mxu0
    %v402 = vadd.f32 %v335, %v401
    %v403 = vand.u32 %v86, 4294901760
    %404 = vmatmul.f32.gmra.mxu0 %v403
    %v405 = vpop.f32.mrf.mxu0
    %v406 = vadd.f32 %v341, %v405
    %v407 = vand.u32 %v89, 4294901760
    %408 = vmatmul.f32.gmra.mxu0 %v407
    %v409 = vpop.f32.mrf.mxu0
    %v410 = vadd.f32 %v347, %v409
    %v411 = vand.u32 %v92, 4294901760
    %412 = vmatmul.f32.gmra.mxu0 %v411
    %v413 = vpop.f32.mrf.mxu0
    %v414 = vadd.f32 %v353, %v413
    %v415 = vand.u32 %v95, 4294901760
    %416 = vmatmul.f32.gmra.mxu0 %v415
    %v417 = vpop.f32.mrf.mxu0
    %v418 = vadd.f32 %v359, %v417
    %v419 = vand.u32 %v98, 4294901760
    %420 = vmatmul.f32.gmra.mxu0 %v419
    %v421 = vpop.f32.mrf.mxu0
    %v422 = vadd.f32 %v365, %v421
    %v423 = vand.u32 %v101, 4294901760
    %424 = vmatmul.f32.gmra.mxu0 %v423
    %v425 = vpop.f32.mrf.mxu0
    %v426 = vadd.f32 %v371, %v425
    %427 = vdwg.mxu0
    %428 = vmatpush.msra.mxu0 0.0
    %429 = vmatpush.msra.mxu0 0.0
    %430 = vmatpush.msra.mxu0 0.0
    %431 = vmatpush.msra.mxu0 0.0
    %432 = vmatpush.msra.mxu0 0.0
    %433 = vmatpush.msra.mxu0 0.0
    %434 = vmatpush.msra.mxu0 0.0
    %435 = vmatpush.msra.mxu0 0.0
    %436 = vmatpush.msra.mxu0 0.0
    %437 = vmatpush.msra.mxu0 0.0
    %438 = vmatpush.msra.mxu0 0.0
    %439 = vmatpush.msra.mxu0 0.0
    %440 = vmatpush.msra.mxu0 0.0
    %441 = vmatpush.msra.mxu0 0.0
    %v442 = vand.u32 %v73, 4294901760
    %443 = vmatpush.msra.mxu0 %v442
    %v444 = vand.u32 %v72, 4294901760
    %445 = vmatpush.msra.mxu0 %v444
    %v446 = vand.u32 %v80, 4294901760
    %447 = vmatmul.f32.gmra.mxu0 %v446
    %v448 = vpop.f32.mrf.mxu0
    %v449 = vadd.f32 %v398, %v448
    %v450 = vand.u32 %v83, 4294901760
    %451 = vmatmul.f32.gmra.mxu0 %v450
    %v452 = vpop.f32.mrf.mxu0
    %v453 = vadd.f32 %v402, %v452
    %v454 = vand.u32 %v86, 4294901760
    %455 = vmatmul.f32.gmra.mxu0 %v454
    %v456 = vpop.f32.mrf.mxu0
    %v457 = vadd.f32 %v406, %v456
    %v458 = vand.u32 %v89, 4294901760
    %459 = vmatmul.f32.gmra.mxu0 %v458
    %v460 = vpop.f32.mrf.mxu0
    %v461 = vadd.f32 %v410, %v460
    %v462 = vand.u32 %v92, 4294901760
    %463 = vmatmul.f32.gmra.mxu0 %v462
    %v464 = vpop.f32.mrf.mxu0
    %v465 = vadd.f32 %v414, %v464
    %v466 = vand.u32 %v95, 4294901760
    %467 = vmatmul.f32.gmra.mxu0 %v466
    %v468 = vpop.f32.mrf.mxu0
    %v469 = vadd.f32 %v418, %v468
    %v470 = vand.u32 %v98, 4294901760
    %471 = vmatmul.f32.gmra.mxu0 %v470
    %v472 = vpop.f32.mrf.mxu0
    %v473 = vadd.f32 %v422, %v472
    %v474 = vand.u32 %v101, 4294901760
    %475 = vmatmul.f32.gmra.mxu0 %v474
    %v476 = vpop.f32.mrf.mxu0
    %v477 = vadd.f32 %v426, %v476
    %478 = vdwg.mxu0
    %v479 = vld [vmem:[%s4] sm:$0xff]
    %v480 = vld [vmem:[%s4 + $0x8] sm:$0xff]
    %v481 = vld [vmem:[%s4 + $0x10] sm:$0xff]
    %v482 = vld [vmem:[%s4 + $0x18] sm:$0xff]
    %v483 = vld [vmem:[%s6] sm:$0x1]
    %v485 = vperm.slane %v483, 0
    %v486 = vld [vmem:[%s1] sm:$0xff]
    %vm487 = vcmask 261120
    %v489 = vsel %vm487, %v486, 0
    %491 = vmatpush.msra.mxu0 0.0
    %492 = vmatpush.msra.mxu0 0.0
    %493 = vmatpush.msra.mxu0 0.0
    %494 = vmatpush.msra.mxu0 0.0
    %495 = vmatpush.msra.mxu0 0.0
    %496 = vmatpush.msra.mxu0 0.0
    %497 = vmatpush.msra.mxu0 0.0
    %498 = vmatpush.msra.mxu0 0.0
    %499 = vmatpush.msra.mxu0 0.0
    %500 = vmatpush.msra.mxu0 0.0
    %501 = vmatpush.msra.mxu0 0.0
    %502 = vmatpush.msra.mxu0 0.0
    %503 = vmatpush.msra.mxu0 %v482
    %504 = vmatpush.msra.mxu0 %v481
    %505 = vmatpush.msra.mxu0 %v480
    %506 = vmatpush.msra.mxu0 %v479
    %507 = vmatmul.f32.gmra.mxu0 %v489
    %v508 = vpop.f32.mrf.mxu0
    %v509 = vadd.f32 0.0, %v508
    %510 = vdwg.mxu0
    %v511 = vadd.f32 %v449, %v509
    %v512 = vxor.u32 %v511, 2147483648
    %v513 = vmul.f32 %v512, 1.442695
    %v514 = vpow.pop %v513
    %v515 = vadd.f32 %v514, 1.0
    %v516 = vrcp.pop %v515
    %v517 = vmul.f32 %v515, %v516
    %v518 = vsub.f32 1.0, %v517
    %v519 = vmul.f32 %v516, %v518
    %v520 = vadd.f32 %v516, %v519
    %vm521 = vweird.f32 %v515
    %vm522 = vweird.f32 %v516
    %vm523 = vmor %vm521, %vm522
    %v524 = vsel %vm523, %v516, %v520
    %v525 = vand.u32 2147483647, %v515
    %vm526 = vcmp.eq.f32.partialorder %v525, 8.507059e+37
    %v527 = vand.u32 %v515, 2147483648
    %v528 = vor.u32 1.1754944e-38, %v527
    %v529 = vsel %vm526, %v528, %v524
    %v530 = vmul.f32 1.0, %v529
    %531 = vrot.lane.b32.xlu0 %v485, 64
    %v532 = vpop.permute.xlu0 %531
    %v534 = vadd.f32 %v509, %v532
    %536 = vrot.lane.b32.xlu0 %v534, 64
    %v537 = vpop.permute.xlu0 %536
    %v539 = vmul.f32 %v530, %v537
    %541 = vrot.lane.b32.xlu0 %v539, 64
    %v542 = vpop.permute.xlu0 %541
    %v544 = vadd.f32 %v449, %v542
    %v545 = vtanh.pop %v544
    %v546 = vsub.f32 1.0, %v530
    %548 = vrot.lane.b32.xlu0 %v545, 96
    %v549 = vpop.permute.xlu0 %548
    %v551 = vmul.f32 %v546, %v549
    %552 = vrot.lane.b32.xlu0 %v486, 32
    %v553 = vpop.permute.xlu0 %552
    %v555 = vmul.f32 %v530, %v553
    %v556 = vadd.f32 %v551, %v555
    %558 = vrot.lane.b32.xlu0 %v556, 96
    %v559 = vpop.permute.xlu0 %558
    %v560 = vsel %vm487, %v559, 0
    %562 = vmatpush.msra.mxu0 0.0
    %563 = vmatpush.msra.mxu0 0.0
    %564 = vmatpush.msra.mxu0 0.0
    %565 = vmatpush.msra.mxu0 0.0
    %566 = vmatpush.msra.mxu0 0.0
    %567 = vmatpush.msra.mxu0 0.0
    %568 = vmatpush.msra.mxu0 0.0
    %569 = vmatpush.msra.mxu0 0.0
    %570 = vmatpush.msra.mxu0 0.0
    %571 = vmatpush.msra.mxu0 0.0
    %572 = vmatpush.msra.mxu0 0.0
    %573 = vmatpush.msra.mxu0 0.0
    %574 = vmatpush.msra.mxu0 %v482
    %575 = vmatpush.msra.mxu0 %v481
    %576 = vmatpush.msra.mxu0 %v480
    %577 = vmatpush.msra.mxu0 %v479
    %578 = vmatmul.f32.gmra.mxu0 %v560
    %v579 = vpop.f32.mrf.mxu0
    %v580 = vadd.f32 0.0, %v579
    %581 = vdwg.mxu0
    %v582 = vadd.f32 %v453, %v580
    %v583 = vxor.u32 %v582, 2147483648
    %v584 = vmul.f32 %v583, 1.442695
    %v585 = vpow.pop %v584
    %v586 = vadd.f32 %v585, 1.0
    %v587 = vrcp.pop %v586
    %v588 = vmul.f32 %v586, %v587
    %v589 = vsub.f32 1.0, %v588
    %v590 = vmul.f32 %v587, %v589
    %v591 = vadd.f32 %v587, %v590
    %vm592 = vweird.f32 %v586
    %vm593 = vweird.f32 %v587
    %vm594 = vmor %vm592, %vm593
    %v595 = vsel %vm594, %v587, %v591
    %v596 = vand.u32 2147483647, %v586
    %vm597 = vcmp.eq.f32.partialorder %v596, 8.507059e+37
    %v598 = vand.u32 %v586, 2147483648
    %v599 = vor.u32 1.1754944e-38, %v598
    %v600 = vsel %vm597, %v599, %v595
    %v601 = vmul.f32 1.0, %v600
    %v602 = vadd.f32 %v580, %v532
    %604 = vrot.lane.b32.xlu0 %v602, 64
    %v605 = vpop.permute.xlu0 %604
    %v607 = vmul.f32 %v601, %v605
    %609 = vrot.lane.b32.xlu0 %v607, 64
    %v610 = vpop.permute.xlu0 %609
    %v612 = vadd.f32 %v453, %v610
    %v613 = vtanh.pop %v612
    %v614 = vsub.f32 1.0, %v601
    %616 = vrot.lane.b32.xlu0 %v613, 96
    %v617 = vpop.permute.xlu0 %616
    %v619 = vmul.f32 %v614, %v617
    %v620 = vmul.f32 %v601, %v556
    %v621 = vadd.f32 %v619, %v620
    %623 = vrot.lane.b32.xlu0 %v621, 96
    %v624 = vpop.permute.xlu0 %623
    %v625 = vsel %vm487, %v624, 0
    %627 = vmatpush.msra.mxu0 0.0
    %628 = vmatpush.msra.mxu0 0.0
    %629 = vmatpush.msra.mxu0 0.0
    %630 = vmatpush.msra.mxu0 0.0
    %631 = vmatpush.msra.mxu0 0.0
    %632 = vmatpush.msra.mxu0 0.0
    %633 = vmatpush.msra.mxu0 0.0
    %634 = vmatpush.msra.mxu0 0.0
    %635 = vmatpush.msra.mxu0 0.0
    %636 = vmatpush.msra.mxu0 0.0
    %637 = vmatpush.msra.mxu0 0.0
    %638 = vmatpush.msra.mxu0 0.0
    %639 = vmatpush.msra.mxu0 %v482
    %640 = vmatpush.msra.mxu0 %v481
    %641 = vmatpush.msra.mxu0 %v480
    %642 = vmatpush.msra.mxu0 %v479
    %643 = vmatmul.f32.gmra.mxu0 %v625
    %v644 = vpop.f32.mrf.mxu0
    %v645 = vadd.f32 0.0, %v644
    %646 = vdwg.mxu0
    %v647 = vadd.f32 %v457, %v645
    %v648 = vxor.u32 %v647, 2147483648
    %v649 = vmul.f32 %v648, 1.442695
    %v650 = vpow.pop %v649
    %v651 = vadd.f32 %v650, 1.0
    %v652 = vrcp.pop %v651
    %v653 = vmul.f32 %v651, %v652
    %v654 = vsub.f32 1.0, %v653
    %v655 = vmul.f32 %v652, %v654
    %v656 = vadd.f32 %v652, %v655
    %vm657 = vweird.f32 %v651
    %vm658 = vweird.f32 %v652
    %vm659 = vmor %vm657, %vm658
    %v660 = vsel %vm659, %v652, %v656
    %v661 = vand.u32 2147483647, %v651
    %vm662 = vcmp.eq.f32.partialorder %v661, 8.507059e+37
    %v663 = vand.u32 %v651, 2147483648
    %v664 = vor.u32 1.1754944e-38, %v663
    %v665 = vsel %vm662, %v664, %v660
    %v666 = vmul.f32 1.0, %v665
    %v667 = vadd.f32 %v645, %v532
    %669 = vrot.lane.b32.xlu0 %v667, 64
    %v670 = vpop.permute.xlu0 %669
    %v672 = vmul.f32 %v666, %v670
    %674 = vrot.lane.b32.xlu0 %v672, 64
    %v675 = vpop.permute.xlu0 %674
    %v677 = vadd.f32 %v457, %v675
    %v678 = vtanh.pop %v677
    %v679 = vsub.f32 1.0, %v666
    %681 = vrot.lane.b32.xlu0 %v678, 96
    %v682 = vpop.permute.xlu0 %681
    %v684 = vmul.f32 %v679, %v682
    %v685 = vmul.f32 %v666, %v621
    %v686 = vadd.f32 %v684, %v685
    %688 = vrot.lane.b32.xlu0 %v686, 96
    %v689 = vpop.permute.xlu0 %688
    %v690 = vsel %vm487, %v689, 0
    %692 = vmatpush.msra.mxu0 0.0
    %693 = vmatpush.msra.mxu0 0.0
    %694 = vmatpush.msra.mxu0 0.0
    %695 = vmatpush.msra.mxu0 0.0
    %696 = vmatpush.msra.mxu0 0.0
    %697 = vmatpush.msra.mxu0 0.0
    %698 = vmatpush.msra.mxu0 0.0
    %699 = vmatpush.msra.mxu0 0.0
    %700 = vmatpush.msra.mxu0 0.0
    %701 = vmatpush.msra.mxu0 0.0
    %702 = vmatpush.msra.mxu0 0.0
    %703 = vmatpush.msra.mxu0 0.0
    %704 = vmatpush.msra.mxu0 %v482
    %705 = vmatpush.msra.mxu0 %v481
    %706 = vmatpush.msra.mxu0 %v480
    %707 = vmatpush.msra.mxu0 %v479
    %708 = vmatmul.f32.gmra.mxu0 %v690
    %v709 = vpop.f32.mrf.mxu0
    %v710 = vadd.f32 0.0, %v709
    %711 = vdwg.mxu0
    %v712 = vadd.f32 %v461, %v710
    %v713 = vxor.u32 %v712, 2147483648
    %v714 = vmul.f32 %v713, 1.442695
    %v715 = vpow.pop %v714
    %v716 = vadd.f32 %v715, 1.0
    %v717 = vrcp.pop %v716
    %v718 = vmul.f32 %v716, %v717
    %v719 = vsub.f32 1.0, %v718
    %v720 = vmul.f32 %v717, %v719
    %v721 = vadd.f32 %v717, %v720
    %vm722 = vweird.f32 %v716
    %vm723 = vweird.f32 %v717
    %vm724 = vmor %vm722, %vm723
    %v725 = vsel %vm724, %v717, %v721
    %v726 = vand.u32 2147483647, %v716
    %vm727 = vcmp.eq.f32.partialorder %v726, 8.507059e+37
    %v728 = vand.u32 %v716, 2147483648
    %v729 = vor.u32 1.1754944e-38, %v728
    %v730 = vsel %vm727, %v729, %v725
    %v731 = vmul.f32 1.0, %v730
    %v732 = vadd.f32 %v710, %v532
    %734 = vrot.lane.b32.xlu0 %v732, 64
    %v735 = vpop.permute.xlu0 %734
    %v737 = vmul.f32 %v731, %v735
    %739 = vrot.lane.b32.xlu0 %v737, 64
    %v740 = vpop.permute.xlu0 %739
    %v742 = vadd.f32 %v461, %v740
    %v743 = vtanh.pop %v742
    %v744 = vsub.f32 1.0, %v731
    %746 = vrot.lane.b32.xlu0 %v743, 96
    %v747 = vpop.permute.xlu0 %746
    %v749 = vmul.f32 %v744, %v747
    %v750 = vmul.f32 %v731, %v686
    %v751 = vadd.f32 %v749, %v750
    %753 = vrot.lane.b32.xlu0 %v751, 96
    %v754 = vpop.permute.xlu0 %753
    %v755 = vsel %vm487, %v754, 0
    %757 = vmatpush.msra.mxu0 0.0
    %758 = vmatpush.msra.mxu0 0.0
    %759 = vmatpush.msra.mxu0 0.0
    %760 = vmatpush.msra.mxu0 0.0
    %761 = vmatpush.msra.mxu0 0.0
    %762 = vmatpush.msra.mxu0 0.0
    %763 = vmatpush.msra.mxu0 0.0
    %764 = vmatpush.msra.mxu0 0.0
    %765 = vmatpush.msra.mxu0 0.0
    %766 = vmatpush.msra.mxu0 0.0
    %767 = vmatpush.msra.mxu0 0.0
    %768 = vmatpush.msra.mxu0 0.0
    %769 = vmatpush.msra.mxu0 %v482
    %770 = vmatpush.msra.mxu0 %v481
    %771 = vmatpush.msra.mxu0 %v480
    %772 = vmatpush.msra.mxu0 %v479
    %773 = vmatmul.f32.gmra.mxu0 %v755
    %v774 = vpop.f32.mrf.mxu0
    %v775 = vadd.f32 0.0, %v774
    %776 = vdwg.mxu0
    %v777 = vadd.f32 %v465, %v775
    %v778 = vxor.u32 %v777, 2147483648
    %v779 = vmul.f32 %v778, 1.442695
    %v780 = vpow.pop %v779
    %v781 = vadd.f32 %v780, 1.0
    %v782 = vrcp.pop %v781
    %v783 = vmul.f32 %v781, %v782
    %v784 = vsub.f32 1.0, %v783
    %v785 = vmul.f32 %v782, %v784
    %v786 = vadd.f32 %v782, %v785
    %vm787 = vweird.f32 %v781
    %vm788 = vweird.f32 %v782
    %vm789 = vmor %vm787, %vm788
    %v790 = vsel %vm789, %v782, %v786
    %v791 = vand.u32 2147483647, %v781
    %vm792 = vcmp.eq.f32.partialorder %v791, 8.507059e+37
    %v793 = vand.u32 %v781, 2147483648
    %v794 = vor.u32 1.1754944e-38, %v793
    %v795 = vsel %vm792, %v794, %v790
    %v796 = vmul.f32 1.0, %v795
    %v797 = vadd.f32 %v775, %v532
    %799 = vrot.lane.b32.xlu0 %v797, 64
    %v800 = vpop.permute.xlu0 %799
    %v802 = vmul.f32 %v796, %v800
    %804 = vrot.lane.b32.xlu0 %v802, 64
    %v805 = vpop.permute.xlu0 %804
    %v807 = vadd.f32 %v465, %v805
    %v808 = vtanh.pop %v807
    %v809 = vsub.f32 1.0, %v796
    %811 = vrot.lane.b32.xlu0 %v808, 96
    %v812 = vpop.permute.xlu0 %811
    %v814 = vmul.f32 %v809, %v812
    %v815 = vmul.f32 %v796, %v751
    %v816 = vadd.f32 %v814, %v815
    %818 = vrot.lane.b32.xlu0 %v816, 96
    %v819 = vpop.permute.xlu0 %818
    %v820 = vsel %vm487, %v819, 0
    %822 = vmatpush.msra.mxu0 0.0
    %823 = vmatpush.msra.mxu0 0.0
    %824 = vmatpush.msra.mxu0 0.0
    %825 = vmatpush.msra.mxu0 0.0
    %826 = vmatpush.msra.mxu0 0.0
    %827 = vmatpush.msra.mxu0 0.0
    %828 = vmatpush.msra.mxu0 0.0
    %829 = vmatpush.msra.mxu0 0.0
    %830 = vmatpush.msra.mxu0 0.0
    %831 = vmatpush.msra.mxu0 0.0
    %832 = vmatpush.msra.mxu0 0.0
    %833 = vmatpush.msra.mxu0 0.0
    %834 = vmatpush.msra.mxu0 %v482
    %835 = vmatpush.msra.mxu0 %v481
    %836 = vmatpush.msra.mxu0 %v480
    %837 = vmatpush.msra.mxu0 %v479
    %838 = vmatmul.f32.gmra.mxu0 %v820
    %v839 = vpop.f32.mrf.mxu0
    %v840 = vadd.f32 0.0, %v839
    %841 = vdwg.mxu0
    %v842 = vadd.f32 %v469, %v840
    %v843 = vxor.u32 %v842, 2147483648
    %v844 = vmul.f32 %v843, 1.442695
    %v845 = vpow.pop %v844
    %v846 = vadd.f32 %v845, 1.0
    %v847 = vrcp.pop %v846
    %v848 = vmul.f32 %v846, %v847
    %v849 = vsub.f32 1.0, %v848
    %v850 = vmul.f32 %v847, %v849
    %v851 = vadd.f32 %v847, %v850
    %vm852 = vweird.f32 %v846
    %vm853 = vweird.f32 %v847
    %vm854 = vmor %vm852, %vm853
    %v855 = vsel %vm854, %v847, %v851
    %v856 = vand.u32 2147483647, %v846
    %vm857 = vcmp.eq.f32.partialorder %v856, 8.507059e+37
    %v858 = vand.u32 %v846, 2147483648
    %v859 = vor.u32 1.1754944e-38, %v858
    %v860 = vsel %vm857, %v859, %v855
    %v861 = vmul.f32 1.0, %v860
    %v862 = vadd.f32 %v840, %v532
    %864 = vrot.lane.b32.xlu0 %v862, 64
    %v865 = vpop.permute.xlu0 %864
    %v867 = vmul.f32 %v861, %v865
    %869 = vrot.lane.b32.xlu0 %v867, 64
    %v870 = vpop.permute.xlu0 %869
    %v872 = vadd.f32 %v469, %v870
    %v873 = vtanh.pop %v872
    %v874 = vsub.f32 1.0, %v861
    %876 = vrot.lane.b32.xlu0 %v873, 96
    %v877 = vpop.permute.xlu0 %876
    %v879 = vmul.f32 %v874, %v877
    %v880 = vmul.f32 %v861, %v816
    %v881 = vadd.f32 %v879, %v880
    %883 = vrot.lane.b32.xlu0 %v881, 96
    %v884 = vpop.permute.xlu0 %883
    %v885 = vsel %vm487, %v884, 0
    %887 = vmatpush.msra.mxu0 0.0
    %888 = vmatpush.msra.mxu0 0.0
    %889 = vmatpush.msra.mxu0 0.0
    %890 = vmatpush.msra.mxu0 0.0
    %891 = vmatpush.msra.mxu0 0.0
    %892 = vmatpush.msra.mxu0 0.0
    %893 = vmatpush.msra.mxu0 0.0
    %894 = vmatpush.msra.mxu0 0.0
    %895 = vmatpush.msra.mxu0 0.0
    %896 = vmatpush.msra.mxu0 0.0
    %897 = vmatpush.msra.mxu0 0.0
    %898 = vmatpush.msra.mxu0 0.0
    %899 = vmatpush.msra.mxu0 %v482
    %900 = vmatpush.msra.mxu0 %v481
    %901 = vmatpush.msra.mxu0 %v480
    %902 = vmatpush.msra.mxu0 %v479
    %903 = vmatmul.f32.gmra.mxu0 %v885
    %v904 = vpop.f32.mrf.mxu0
    %v905 = vadd.f32 0.0, %v904
    %906 = vdwg.mxu0
    %v907 = vadd.f32 %v473, %v905
    %v908 = vxor.u32 %v907, 2147483648
    %v909 = vmul.f32 %v908, 1.442695
    %v910 = vpow.pop %v909
    %v911 = vadd.f32 %v910, 1.0
    %v912 = vrcp.pop %v911
    %v913 = vmul.f32 %v911, %v912
    %v914 = vsub.f32 1.0, %v913
    %v915 = vmul.f32 %v912, %v914
    %v916 = vadd.f32 %v912, %v915
    %vm917 = vweird.f32 %v911
    %vm918 = vweird.f32 %v912
    %vm919 = vmor %vm917, %vm918
    %v920 = vsel %vm919, %v912, %v916
    %v921 = vand.u32 2147483647, %v911
    %vm922 = vcmp.eq.f32.partialorder %v921, 8.507059e+37
    %v923 = vand.u32 %v911, 2147483648
    %v924 = vor.u32 1.1754944e-38, %v923
    %v925 = vsel %vm922, %v924, %v920
    %v926 = vmul.f32 1.0, %v925
    %v927 = vadd.f32 %v905, %v532
    %929 = vrot.lane.b32.xlu0 %v927, 64
    %v930 = vpop.permute.xlu0 %929
    %v932 = vmul.f32 %v926, %v930
    %934 = vrot.lane.b32.xlu0 %v932, 64
    %v935 = vpop.permute.xlu0 %934
    %v937 = vadd.f32 %v473, %v935
    %v938 = vtanh.pop %v937
    %v939 = vsub.f32 1.0, %v926
    %941 = vrot.lane.b32.xlu0 %v938, 96
    %v942 = vpop.permute.xlu0 %941
    %v944 = vmul.f32 %v939, %v942
    %v945 = vmul.f32 %v926, %v881
    %v946 = vadd.f32 %v944, %v945
    %948 = vrot.lane.b32.xlu0 %v946, 96
    %v949 = vpop.permute.xlu0 %948
    %v950 = vsel %vm487, %v949, 0
    %952 = vmatpush.msra.mxu0 0.0
    %953 = vmatpush.msra.mxu0 0.0
    %954 = vmatpush.msra.mxu0 0.0
    %955 = vmatpush.msra.mxu0 0.0
    %956 = vmatpush.msra.mxu0 0.0
    %957 = vmatpush.msra.mxu0 0.0
    %958 = vmatpush.msra.mxu0 0.0
    %959 = vmatpush.msra.mxu0 0.0
    %960 = vmatpush.msra.mxu0 0.0
    %961 = vmatpush.msra.mxu0 0.0
    %962 = vmatpush.msra.mxu0 0.0
    %963 = vmatpush.msra.mxu0 0.0
    %964 = vmatpush.msra.mxu0 %v482
    %965 = vmatpush.msra.mxu0 %v481
    %966 = vmatpush.msra.mxu0 %v480
    %967 = vmatpush.msra.mxu0 %v479
    %968 = vmatmul.f32.gmra.mxu0 %v950
    %v969 = vpop.f32.mrf.mxu0
    %v970 = vadd.f32 0.0, %v969
    %971 = vdwg.mxu0
    %v972 = vadd.f32 %v477, %v970
    %v973 = vxor.u32 %v972, 2147483648
    %v974 = vmul.f32 %v973, 1.442695
    %v975 = vpow.pop %v974
    %v976 = vadd.f32 %v975, 1.0
    %v977 = vrcp.pop %v976
    %v978 = vmul.f32 %v976, %v977
    %v979 = vsub.f32 1.0, %v978
    %v980 = vmul.f32 %v977, %v979
    %v981 = vadd.f32 %v977, %v980
    %vm982 = vweird.f32 %v976
    %vm983 = vweird.f32 %v977
    %vm984 = vmor %vm982, %vm983
    %v985 = vsel %vm984, %v977, %v981
    %v986 = vand.u32 2147483647, %v976
    %vm987 = vcmp.eq.f32.partialorder %v986, 8.507059e+37
    %v988 = vand.u32 %v976, 2147483648
    %v989 = vor.u32 1.1754944e-38, %v988
    %v990 = vsel %vm987, %v989, %v985
    %v991 = vmul.f32 1.0, %v990
    %v992 = vadd.f32 %v970, %v532
    %994 = vrot.lane.b32.xlu0 %v992, 64
    %v995 = vpop.permute.xlu0 %994
    %v997 = vmul.f32 %v991, %v995
    %999 = vrot.lane.b32.xlu0 %v997, 64
    %v1000 = vpop.permute.xlu0 %999
    %v1002 = vadd.f32 %v477, %v1000
    %v1003 = vtanh.pop %v1002
    %v1004 = vsub.f32 1.0, %v991
    %1006 = vrot.lane.b32.xlu0 %v1003, 96
    %v1007 = vpop.permute.xlu0 %1006
    %v1009 = vmul.f32 %v1004, %v1007
    %v1010 = vmul.f32 %v991, %v946
    %v1011 = vadd.f32 %v1009, %v1010
    %1013 = vrot.lane.b32.xlu0 %v1011, 96
    %v1014 = vpop.permute.xlu0 %1013
    %1016 = vst.msk [vmem:[%s10] sm:$0xff] %vm487, %v1014
    %s1017 = scalar_lea.vmem %s4, 32
    %v1018 = vld [vmem:[%s1017] sm:$0xff]
    %v1019 = vld [vmem:[%s1017 + $0x8] sm:$0xff]
    %v1020 = vld [vmem:[%s1017 + $0x10] sm:$0xff]
    %v1021 = vld [vmem:[%s1017 + $0x18] sm:$0xff]
    %s1022 = scalar_lea.vmem %s6, 1
    %v1023 = vld [vmem:[%s1022] sm:$0x1]
    %v1025 = vperm.slane %v1023, 0
    %v1026 = vld [vmem:[%s3] sm:$0xff]
    %v1027 = vld [vmem:[%s3 + $0x8] sm:$0xff]
    %v1028 = vld [vmem:[%s3 + $0x10] sm:$0xff]
    %v1029 = vld [vmem:[%s3 + $0x18] sm:$0xff]
    %s1030 = scalar_lea.vmem %s5, 1
    %v1031 = vld [vmem:[%s1030] sm:$0x1]
    %v1033 = vperm.slane %v1031, 0
    %s1035 = scalar_lea.vmem %s1, 8
    %v1036 = vld [vmem:[%s1035] sm:$0xff]
    %1037 = vmatpush.msra.mxu0 0.0
    %1038 = vmatpush.msra.mxu0 0.0
    %1039 = vmatpush.msra.mxu0 0.0
    %1040 = vmatpush.msra.mxu0 0.0
    %1041 = vmatpush.msra.mxu0 0.0
    %1042 = vmatpush.msra.mxu0 0.0
    %1043 = vmatpush.msra.mxu0 0.0
    %1044 = vmatpush.msra.mxu0 0.0
    %1045 = vmatpush.msra.mxu0 0.0
    %1046 = vmatpush.msra.mxu0 0.0
    %1047 = vmatpush.msra.mxu0 0.0
    %1048 = vmatpush.msra.mxu0 0.0
    %1049 = vmatpush.msra.mxu0 %v1029
    %1050 = vmatpush.msra.mxu0 %v1028
    %1051 = vmatpush.msra.mxu0 %v1027
    %1052 = vmatpush.msra.mxu0 %v1026
    %1053 = vmatmul.f32.gmra.mxu0 %v560
    %v1054 = vpop.f32.mrf.mxu0
    %v1055 = vadd.f32 %v1033, %v1054
    %1056 = vdwg.mxu0
    %v1058 = vsel %vm487, %v1036, 0
    %1060 = vmatpush.msra.mxu0 0.0
    %1061 = vmatpush.msra.mxu0 0.0
    %1062 = vmatpush.msra.mxu0 0.0
    %1063 = vmatpush.msra.mxu0 0.0
    %1064 = vmatpush.msra.mxu0 0.0
    %1065 = vmatpush.msra.mxu0 0.0
    %1066 = vmatpush.msra.mxu0 0.0
    %1067 = vmatpush.msra.mxu0 0.0
    %1068 = vmatpush.msra.mxu0 0.0
    %1069 = vmatpush.msra.mxu0 0.0
    %1070 = vmatpush.msra.mxu0 0.0
    %1071 = vmatpush.msra.mxu0 0.0
    %1072 = vmatpush.msra.mxu0 %v1021
    %1073 = vmatpush.msra.mxu0 %v1020
    %1074 = vmatpush.msra.mxu0 %v1019
    %1075 = vmatpush.msra.mxu0 %v1018
    %1076 = vmatmul.f32.gmra.mxu0 %v1058
    %v1077 = vpop.f32.mrf.mxu0
    %v1078 = vadd.f32 0.0, %v1077
    %1079 = vdwg.mxu0
    %v1080 = vadd.f32 %v1055, %v1078
    %v1081 = vxor.u32 %v1080, 2147483648
    %v1082 = vmul.f32 %v1081, 1.442695
    %v1083 = vpow.pop %v1082
    %v1084 = vadd.f32 %v1083, 1.0
    %v1085 = vrcp.pop %v1084
    %v1086 = vmul.f32 %v1084, %v1085
    %v1087 = vsub.f32 1.0, %v1086
    %v1088 = vmul.f32 %v1085, %v1087
    %v1089 = vadd.f32 %v1085, %v1088
    %vm1090 = vweird.f32 %v1084
    %vm1091 = vweird.f32 %v1085
    %vm1092 = vmor %vm1090, %vm1091
    %v1093 = vsel %vm1092, %v1085, %v1089
    %v1094 = vand.u32 2147483647, %v1084
    %vm1095 = vcmp.eq.f32.partialorder %v1094, 8.507059e+37
    %v1096 = vand.u32 %v1084, 2147483648
    %v1097 = vor.u32 1.1754944e-38, %v1096
    %v1098 = vsel %vm1095, %v1097, %v1093
    %v1099 = vmul.f32 1.0, %v1098
    %1100 = vrot.lane.b32.xlu0 %v1025, 64
    %v1101 = vpop.permute.xlu0 %1100
    %v1103 = vadd.f32 %v1078, %v1101
    %1105 = vrot.lane.b32.xlu0 %v1103, 64
    %v1106 = vpop.permute.xlu0 %1105
    %v1108 = vmul.f32 %v1099, %v1106
    %1110 = vrot.lane.b32.xlu0 %v1108, 64
    %v1111 = vpop.permute.xlu0 %1110
    %v1113 = vadd.f32 %v1055, %v1111
    %v1114 = vtanh.pop %v1113
    %v1115 = vsub.f32 1.0, %v1099
    %1117 = vrot.lane.b32.xlu0 %v1114, 96
    %v1118 = vpop.permute.xlu0 %1117
    %v1120 = vmul.f32 %v1115, %v1118
    %1121 = vrot.lane.b32.xlu0 %v1036, 32
    %v1122 = vpop.permute.xlu0 %1121
    %v1124 = vmul.f32 %v1099, %v1122
    %v1125 = vadd.f32 %v1120, %v1124
    %1127 = vrot.lane.b32.xlu0 %v1125, 96
    %v1128 = vpop.permute.xlu0 %1127
    %1130 = vst.msk [vmem:[#allocation2] sm:$0xff] %vm487, %v1128
    %1131 = vmatpush.msra.mxu0 0.0
    %1132 = vmatpush.msra.mxu0 0.0
    %1133 = vmatpush.msra.mxu0 0.0
    %1134 = vmatpush.msra.mxu0 0.0
    %1135 = vmatpush.msra.mxu0 0.0
    %1136 = vmatpush.msra.mxu0 0.0
    %1137 = vmatpush.msra.mxu0 0.0
    %1138 = vmatpush.msra.mxu0 0.0
    %1139 = vmatpush.msra.mxu0 0.0
    %1140 = vmatpush.msra.mxu0 0.0
    %1141 = vmatpush.msra.mxu0 0.0
    %1142 = vmatpush.msra.mxu0 0.0
    %1143 = vmatpush.msra.mxu0 %v1029
    %1144 = vmatpush.msra.mxu0 %v1028
    %1145 = vmatpush.msra.mxu0 %v1027
    %1146 = vmatpush.msra.mxu0 %v1026
    %1147 = vmatmul.f32.gmra.mxu0 %v625
    %v1148 = vpop.f32.mrf.mxu0
    %v1149 = vadd.f32 %v1033, %v1148
    %1150 = vdwg.mxu0
    %v1151 = vsel %vm487, %v1128, 0
    %1153 = vmatpush.msra.mxu0 0.0
    %1154 = vmatpush.msra.mxu0 0.0
    %1155 = vmatpush.msra.mxu0 0.0
    %1156 = vmatpush.msra.mxu0 0.0
    %1157 = vmatpush.msra.mxu0 0.0
    %1158 = vmatpush.msra.mxu0 0.0
    %1159 = vmatpush.msra.mxu0 0.0
    %1160 = vmatpush.msra.mxu0 0.0
    %1161 = vmatpush.msra.mxu0 0.0
    %1162 = vmatpush.msra.mxu0 0.0
    %1163 = vmatpush.msra.mxu0 0.0
    %1164 = vmatpush.msra.mxu0 0.0
    %1165 = vmatpush.msra.mxu0 %v1021
    %1166 = vmatpush.msra.mxu0 %v1020
    %1167 = vmatpush.msra.mxu0 %v1019
    %1168 = vmatpush.msra.mxu0 %v1018
    %1169 = vmatmul.f32.gmra.mxu0 %v1151
    %v1170 = vpop.f32.mrf.mxu0
    %v1171 = vadd.f32 0.0, %v1170
    %1172 = vdwg.mxu0
    %v1173 = vadd.f32 %v1149, %v1171
    %v1174 = vxor.u32 %v1173, 2147483648
    %v1175 = vmul.f32 %v1174, 1.442695
    %v1176 = vpow.pop %v1175
    %v1177 = vadd.f32 %v1176, 1.0
    %v1178 = vrcp.pop %v1177
    %v1179 = vmul.f32 %v1177, %v1178
    %v1180 = vsub.f32 1.0, %v1179
    %v1181 = vmul.f32 %v1178, %v1180
    %v1182 = vadd.f32 %v1178, %v1181
    %vm1183 = vweird.f32 %v1177
    %vm1184 = vweird.f32 %v1178
    %vm1185 = vmor %vm1183, %vm1184
    %v1186 = vsel %vm1185, %v1178, %v1182
    %v1187 = vand.u32 2147483647, %v1177
    %vm1188 = vcmp.eq.f32.partialorder %v1187, 8.507059e+37
    %v1189 = vand.u32 %v1177, 2147483648
    %v1190 = vor.u32 1.1754944e-38, %v1189
    %v1191 = vsel %vm1188, %v1190, %v1186
    %v1192 = vmul.f32 1.0, %v1191
    %v1193 = vadd.f32 %v1171, %v1101
    %1195 = vrot.lane.b32.xlu0 %v1193, 64
    %v1196 = vpop.permute.xlu0 %1195
    %v1198 = vmul.f32 %v1192, %v1196
    %1200 = vrot.lane.b32.xlu0 %v1198, 64
    %v1201 = vpop.permute.xlu0 %1200
    %v1203 = vadd.f32 %v1149, %v1201
    %v1204 = vtanh.pop %v1203
    %v1205 = vsub.f32 1.0, %v1192
    %1207 = vrot.lane.b32.xlu0 %v1204, 96
    %v1208 = vpop.permute.xlu0 %1207
    %v1210 = vmul.f32 %v1205, %v1208
    %v1211 = vmul.f32 %v1192, %v1125
    %v1212 = vadd.f32 %v1210, %v1211
    %1214 = vrot.lane.b32.xlu0 %v1212, 96
    %v1215 = vpop.permute.xlu0 %1214
    %1217 = vst.msk [vmem:[#allocation2 + $0x8] sm:$0xff] %vm487, %v1215
    %1218 = vmatpush.msra.mxu0 0.0
    %1219 = vmatpush.msra.mxu0 0.0
    %1220 = vmatpush.msra.mxu0 0.0
    %1221 = vmatpush.msra.mxu0 0.0
    %1222 = vmatpush.msra.mxu0 0.0
    %1223 = vmatpush.msra.mxu0 0.0
    %1224 = vmatpush.msra.mxu0 0.0
    %1225 = vmatpush.msra.mxu0 0.0
    %1226 = vmatpush.msra.mxu0 0.0
    %1227 = vmatpush.msra.mxu0 0.0
    %1228 = vmatpush.msra.mxu0 0.0
    %1229 = vmatpush.msra.mxu0 0.0
    %1230 = vmatpush.msra.mxu0 %v1029
    %1231 = vmatpush.msra.mxu0 %v1028
    %1232 = vmatpush.msra.mxu0 %v1027
    %1233 = vmatpush.msra.mxu0 %v1026
    %1234 = vmatmul.f32.gmra.mxu0 %v690
    %v1235 = vpop.f32.mrf.mxu0
    %v1236 = vadd.f32 %v1033, %v1235
    %1237 = vdwg.mxu0
    %v1238 = vsel %vm487, %v1215, 0
    %1240 = vmatpush.msra.mxu0 0.0
    %1241 = vmatpush.msra.mxu0 0.0
    %1242 = vmatpush.msra.mxu0 0.0
    %1243 = vmatpush.msra.mxu0 0.0
    %1244 = vmatpush.msra.mxu0 0.0
    %1245 = vmatpush.msra.mxu0 0.0
    %1246 = vmatpush.msra.mxu0 0.0
    %1247 = vmatpush.msra.mxu0 0.0
    %1248 = vmatpush.msra.mxu0 0.0
    %1249 = vmatpush.msra.mxu0 0.0
    %1250 = vmatpush.msra.mxu0 0.0
    %1251 = vmatpush.msra.mxu0 0.0
    %1252 = vmatpush.msra.mxu0 %v1021
    %1253 = vmatpush.msra.mxu0 %v1020
    %1254 = vmatpush.msra.mxu0 %v1019
    %1255 = vmatpush.msra.mxu0 %v1018
    %1256 = vmatmul.f32.gmra.mxu0 %v1238
    %v1257 = vpop.f32.mrf.mxu0
    %v1258 = vadd.f32 0.0, %v1257
    %1259 = vdwg.mxu0
    %v1260 = vadd.f32 %v1236, %v1258
    %v1261 = vxor.u32 %v1260, 2147483648
    %v1262 = vmul.f32 %v1261, 1.442695
    %v1263 = vpow.pop %v1262
    %v1264 = vadd.f32 %v1263, 1.0
    %v1265 = vrcp.pop %v1264
    %v1266 = vmul.f32 %v1264, %v1265
    %v1267 = vsub.f32 1.0, %v1266
    %v1268 = vmul.f32 %v1265, %v1267
    %v1269 = vadd.f32 %v1265, %v1268
    %vm1270 = vweird.f32 %v1264
    %vm1271 = vweird.f32 %v1265
    %vm1272 = vmor %vm1270, %vm1271
    %v1273 = vsel %vm1272, %v1265, %v1269
    %v1274 = vand.u32 2147483647, %v1264
    %vm1275 = vcmp.eq.f32.partialorder %v1274, 8.507059e+37
    %v1276 = vand.u32 %v1264, 2147483648
    %v1277 = vor.u32 1.1754944e-38, %v1276
    %v1278 = vsel %vm1275, %v1277, %v1273
    %v1279 = vmul.f32 1.0, %v1278
    %v1280 = vadd.f32 %v1258, %v1101
    %1282 = vrot.lane.b32.xlu0 %v1280, 64
    %v1283 = vpop.permute.xlu0 %1282
    %v1285 = vmul.f32 %v1279, %v1283
    %1287 = vrot.lane.b32.xlu0 %v1285, 64
    %v1288 = vpop.permute.xlu0 %1287
    %v1290 = vadd.f32 %v1236, %v1288
    %v1291 = vtanh.pop %v1290
    %v1292 = vsub.f32 1.0, %v1279
    %1294 = vrot.lane.b32.xlu0 %v1291, 96
    %v1295 = vpop.permute.xlu0 %1294
    %v1297 = vmul.f32 %v1292, %v1295
    %v1298 = vmul.f32 %v1279, %v1212
    %v1299 = vadd.f32 %v1297, %v1298
    %1301 = vrot.lane.b32.xlu0 %v1299, 96
    %v1302 = vpop.permute.xlu0 %1301
    %1304 = vst.msk [vmem:[#allocation2 + $0x10] sm:$0xff] %vm487, %v1302
    %1305 = vmatpush.msra.mxu0 0.0
    %1306 = vmatpush.msra.mxu0 0.0
    %1307 = vmatpush.msra.mxu0 0.0
    %1308 = vmatpush.msra.mxu0 0.0
    %1309 = vmatpush.msra.mxu0 0.0
    %1310 = vmatpush.msra.mxu0 0.0
    %1311 = vmatpush.msra.mxu0 0.0
    %1312 = vmatpush.msra.mxu0 0.0
    %1313 = vmatpush.msra.mxu0 0.0
    %1314 = vmatpush.msra.mxu0 0.0
    %1315 = vmatpush.msra.mxu0 0.0
    %1316 = vmatpush.msra.mxu0 0.0
    %1317 = vmatpush.msra.mxu0 %v1029
    %1318 = vmatpush.msra.mxu0 %v1028
    %1319 = vmatpush.msra.mxu0 %v1027
    %1320 = vmatpush.msra.mxu0 %v1026
    %1321 = vmatmul.f32.gmra.mxu0 %v755
    %v1322 = vpop.f32.mrf.mxu0
    %v1323 = vadd.f32 %v1033, %v1322
    %1324 = vdwg.mxu0
    %v1325 = vsel %vm487, %v1302, 0
    %1327 = vmatpush.msra.mxu0 0.0
    %1328 = vmatpush.msra.mxu0 0.0
    %1329 = vmatpush.msra.mxu0 0.0
    %1330 = vmatpush.msra.mxu0 0.0
    %1331 = vmatpush.msra.mxu0 0.0
    %1332 = vmatpush.msra.mxu0 0.0
    %1333 = vmatpush.msra.mxu0 0.0
    %1334 = vmatpush.msra.mxu0 0.0
    %1335 = vmatpush.msra.mxu0 0.0
    %1336 = vmatpush.msra.mxu0 0.0
    %1337 = vmatpush.msra.mxu0 0.0
    %1338 = vmatpush.msra.mxu0 0.0
    %1339 = vmatpush.msra.mxu0 %v1021
    %1340 = vmatpush.msra.mxu0 %v1020
    %1341 = vmatpush.msra.mxu0 %v1019
    %1342 = vmatpush.msra.mxu0 %v1018
    %1343 = vmatmul.f32.gmra.mxu0 %v1325
    %v1344 = vpop.f32.mrf.mxu0
    %v1345 = vadd.f32 0.0, %v1344
    %1346 = vdwg.mxu0
    %v1347 = vadd.f32 %v1323, %v1345
    %v1348 = vxor.u32 %v1347, 2147483648
    %v1349 = vmul.f32 %v1348, 1.442695
    %v1350 = vpow.pop %v1349
    %v1351 = vadd.f32 %v1350, 1.0
    %v1352 = vrcp.pop %v1351
    %v1353 = vmul.f32 %v1351, %v1352
    %v1354 = vsub.f32 1.0, %v1353
    %v1355 = vmul.f32 %v1352, %v1354
    %v1356 = vadd.f32 %v1352, %v1355
    %vm1357 = vweird.f32 %v1351
    %vm1358 = vweird.f32 %v1352
    %vm1359 = vmor %vm1357, %vm1358
    %v1360 = vsel %vm1359, %v1352, %v1356
    %v1361 = vand.u32 2147483647, %v1351
    %vm1362 = vcmp.eq.f32.partialorder %v1361, 8.507059e+37
    %v1363 = vand.u32 %v1351, 2147483648
    %v1364 = vor.u32 1.1754944e-38, %v1363
    %v1365 = vsel %vm1362, %v1364, %v1360
    %v1366 = vmul.f32 1.0, %v1365
    %v1367 = vadd.f32 %v1345, %v1101
    %1369 = vrot.lane.b32.xlu0 %v1367, 64
    %v1370 = vpop.permute.xlu0 %1369
    %v1372 = vmul.f32 %v1366, %v1370
    %1374 = vrot.lane.b32.xlu0 %v1372, 64
    %v1375 = vpop.permute.xlu0 %1374
    %v1377 = vadd.f32 %v1323, %v1375
    %v1378 = vtanh.pop %v1377
    %v1379 = vsub.f32 1.0, %v1366
    %1381 = vrot.lane.b32.xlu0 %v1378, 96
    %v1382 = vpop.permute.xlu0 %1381
    %v1384 = vmul.f32 %v1379, %v1382
    %v1385 = vmul.f32 %v1366, %v1299
    %v1386 = vadd.f32 %v1384, %v1385
    %1388 = vrot.lane.b32.xlu0 %v1386, 96
    %v1389 = vpop.permute.xlu0 %1388
    %1391 = vst.msk [vmem:[#allocation2 + $0x18] sm:$0xff] %vm487, %v1389
    %1392 = vmatpush.msra.mxu0 0.0
    %1393 = vmatpush.msra.mxu0 0.0
    %1394 = vmatpush.msra.mxu0 0.0
    %1395 = vmatpush.msra.mxu0 0.0
    %1396 = vmatpush.msra.mxu0 0.0
    %1397 = vmatpush.msra.mxu0 0.0
    %1398 = vmatpush.msra.mxu0 0.0
    %1399 = vmatpush.msra.mxu0 0.0
    %1400 = vmatpush.msra.mxu0 0.0
    %1401 = vmatpush.msra.mxu0 0.0
    %1402 = vmatpush.msra.mxu0 0.0
    %1403 = vmatpush.msra.mxu0 0.0
    %1404 = vmatpush.msra.mxu0 %v1029
    %1405 = vmatpush.msra.mxu0 %v1028
    %1406 = vmatpush.msra.mxu0 %v1027
    %1407 = vmatpush.msra.mxu0 %v1026
    %1408 = vmatmul.f32.gmra.mxu0 %v820
    %v1409 = vpop.f32.mrf.mxu0
    %v1410 = vadd.f32 %v1033, %v1409
    %1411 = vdwg.mxu0
    %v1412 = vsel %vm487, %v1389, 0
    %1414 = vmatpush.msra.mxu0 0.0
    %1415 = vmatpush.msra.mxu0 0.0
    %1416 = vmatpush.msra.mxu0 0.0
    %1417 = vmatpush.msra.mxu0 0.0
    %1418 = vmatpush.msra.mxu0 0.0
    %1419 = vmatpush.msra.mxu0 0.0
    %1420 = vmatpush.msra.mxu0 0.0
    %1421 = vmatpush.msra.mxu0 0.0
    %1422 = vmatpush.msra.mxu0 0.0
    %1423 = vmatpush.msra.mxu0 0.0
    %1424 = vmatpush.msra.mxu0 0.0
    %1425 = vmatpush.msra.mxu0 0.0
    %1426 = vmatpush.msra.mxu0 %v1021
    %1427 = vmatpush.msra.mxu0 %v1020
    %1428 = vmatpush.msra.mxu0 %v1019
    %1429 = vmatpush.msra.mxu0 %v1018
    %1430 = vmatmul.f32.gmra.mxu0 %v1412
    %v1431 = vpop.f32.mrf.mxu0
    %v1432 = vadd.f32 0.0, %v1431
    %1433 = vdwg.mxu0
    %v1434 = vadd.f32 %v1410, %v1432
    %v1435 = vxor.u32 %v1434, 2147483648
    %v1436 = vmul.f32 %v1435, 1.442695
    %v1437 = vpow.pop %v1436
    %v1438 = vadd.f32 %v1437, 1.0
    %v1439 = vrcp.pop %v1438
    %v1440 = vmul.f32 %v1438, %v1439
    %v1441 = vsub.f32 1.0, %v1440
    %v1442 = vmul.f32 %v1439, %v1441
    %v1443 = vadd.f32 %v1439, %v1442
    %vm1444 = vweird.f32 %v1438
    %vm1445 = vweird.f32 %v1439
    %vm1446 = vmor %vm1444, %vm1445
    %v1447 = vsel %vm1446, %v1439, %v1443
    %v1448 = vand.u32 2147483647, %v1438
    %vm1449 = vcmp.eq.f32.partialorder %v1448, 8.507059e+37
    %v1450 = vand.u32 %v1438, 2147483648
    %v1451 = vor.u32 1.1754944e-38, %v1450
    %v1452 = vsel %vm1449, %v1451, %v1447
    %v1453 = vmul.f32 1.0, %v1452
    %v1454 = vadd.f32 %v1432, %v1101
    %1456 = vrot.lane.b32.xlu0 %v1454, 64
    %v1457 = vpop.permute.xlu0 %1456
    %v1459 = vmul.f32 %v1453, %v1457
    %1461 = vrot.lane.b32.xlu0 %v1459, 64
    %v1462 = vpop.permute.xlu0 %1461
    %v1464 = vadd.f32 %v1410, %v1462
    %v1465 = vtanh.pop %v1464
    %v1466 = vsub.f32 1.0, %v1453
    %1468 = vrot.lane.b32.xlu0 %v1465, 96
    %v1469 = vpop.permute.xlu0 %1468
    %v1471 = vmul.f32 %v1466, %v1469
    %v1472 = vmul.f32 %v1453, %v1386
    %v1473 = vadd.f32 %v1471, %v1472
    %1475 = vrot.lane.b32.xlu0 %v1473, 96
    %v1476 = vpop.permute.xlu0 %1475
    %1478 = vst.msk [vmem:[#allocation2 + $0x20] sm:$0xff] %vm487, %v1476
    %1479 = vmatpush.msra.mxu0 0.0
    %1480 = vmatpush.msra.mxu0 0.0
    %1481 = vmatpush.msra.mxu0 0.0
    %1482 = vmatpush.msra.mxu0 0.0
    %1483 = vmatpush.msra.mxu0 0.0
    %1484 = vmatpush.msra.mxu0 0.0
    %1485 = vmatpush.msra.mxu0 0.0
    %1486 = vmatpush.msra.mxu0 0.0
    %1487 = vmatpush.msra.mxu0 0.0
    %1488 = vmatpush.msra.mxu0 0.0
    %1489 = vmatpush.msra.mxu0 0.0
    %1490 = vmatpush.msra.mxu0 0.0
    %1491 = vmatpush.msra.mxu0 %v1029
    %1492 = vmatpush.msra.mxu0 %v1028
    %1493 = vmatpush.msra.mxu0 %v1027
    %1494 = vmatpush.msra.mxu0 %v1026
    %1495 = vmatmul.f32.gmra.mxu0 %v885
    %v1496 = vpop.f32.mrf.mxu0
    %v1497 = vadd.f32 %v1033, %v1496
    %1498 = vdwg.mxu0
    %v1499 = vsel %vm487, %v1476, 0
    %1501 = vmatpush.msra.mxu0 0.0
    %1502 = vmatpush.msra.mxu0 0.0
    %1503 = vmatpush.msra.mxu0 0.0
    %1504 = vmatpush.msra.mxu0 0.0
    %1505 = vmatpush.msra.mxu0 0.0
    %1506 = vmatpush.msra.mxu0 0.0
    %1507 = vmatpush.msra.mxu0 0.0
    %1508 = vmatpush.msra.mxu0 0.0
    %1509 = vmatpush.msra.mxu0 0.0
    %1510 = vmatpush.msra.mxu0 0.0
    %1511 = vmatpush.msra.mxu0 0.0
    %1512 = vmatpush.msra.mxu0 0.0
    %1513 = vmatpush.msra.mxu0 %v1021
    %1514 = vmatpush.msra.mxu0 %v1020
    %1515 = vmatpush.msra.mxu0 %v1019
    %1516 = vmatpush.msra.mxu0 %v1018
    %1517 = vmatmul.f32.gmra.mxu0 %v1499
    %v1518 = vpop.f32.mrf.mxu0
    %v1519 = vadd.f32 0.0, %v1518
    %1520 = vdwg.mxu0
    %v1521 = vadd.f32 %v1497, %v1519
    %v1522 = vxor.u32 %v1521, 2147483648
    %v1523 = vmul.f32 %v1522, 1.442695
    %v1524 = vpow.pop %v1523
    %v1525 = vadd.f32 %v1524, 1.0
    %v1526 = vrcp.pop %v1525
    %v1527 = vmul.f32 %v1525, %v1526
    %v1528 = vsub.f32 1.0, %v1527
    %v1529 = vmul.f32 %v1526, %v1528
    %v1530 = vadd.f32 %v1526, %v1529
    %vm1531 = vweird.f32 %v1525
    %vm1532 = vweird.f32 %v1526
    %vm1533 = vmor %vm1531, %vm1532
    %v1534 = vsel %vm1533, %v1526, %v1530
    %v1535 = vand.u32 2147483647, %v1525
    %vm1536 = vcmp.eq.f32.partialorder %v1535, 8.507059e+37
    %v1537 = vand.u32 %v1525, 2147483648
    %v1538 = vor.u32 1.1754944e-38, %v1537
    %v1539 = vsel %vm1536, %v1538, %v1534
    %v1540 = vmul.f32 1.0, %v1539
    %v1541 = vadd.f32 %v1519, %v1101
    %1543 = vrot.lane.b32.xlu0 %v1541, 64
    %v1544 = vpop.permute.xlu0 %1543
    %v1546 = vmul.f32 %v1540, %v1544
    %1548 = vrot.lane.b32.xlu0 %v1546, 64
    %v1549 = vpop.permute.xlu0 %1548
    %v1551 = vadd.f32 %v1497, %v1549
    %v1552 = vtanh.pop %v1551
    %v1553 = vsub.f32 1.0, %v1540
    %1555 = vrot.lane.b32.xlu0 %v1552, 96
    %v1556 = vpop.permute.xlu0 %1555
    %v1558 = vmul.f32 %v1553, %v1556
    %v1559 = vmul.f32 %v1540, %v1473
    %v1560 = vadd.f32 %v1558, %v1559
    %1562 = vrot.lane.b32.xlu0 %v1560, 96
    %v1563 = vpop.permute.xlu0 %1562
    %1565 = vst.msk [vmem:[#allocation2 + $0x28] sm:$0xff] %vm487, %v1563
    %1566 = vmatpush.msra.mxu0 0.0
    %1567 = vmatpush.msra.mxu0 0.0
    %1568 = vmatpush.msra.mxu0 0.0
    %1569 = vmatpush.msra.mxu0 0.0
    %1570 = vmatpush.msra.mxu0 0.0
    %1571 = vmatpush.msra.mxu0 0.0
    %1572 = vmatpush.msra.mxu0 0.0
    %1573 = vmatpush.msra.mxu0 0.0
    %1574 = vmatpush.msra.mxu0 0.0
    %1575 = vmatpush.msra.mxu0 0.0
    %1576 = vmatpush.msra.mxu0 0.0
    %1577 = vmatpush.msra.mxu0 0.0
    %1578 = vmatpush.msra.mxu0 %v1029
    %1579 = vmatpush.msra.mxu0 %v1028
    %1580 = vmatpush.msra.mxu0 %v1027
    %1581 = vmatpush.msra.mxu0 %v1026
    %1582 = vmatmul.f32.gmra.mxu0 %v950
    %v1583 = vpop.f32.mrf.mxu0
    %v1584 = vadd.f32 %v1033, %v1583
    %1585 = vdwg.mxu0
    %v1586 = vsel %vm487, %v1563, 0
    %1588 = vmatpush.msra.mxu0 0.0
    %1589 = vmatpush.msra.mxu0 0.0
    %1590 = vmatpush.msra.mxu0 0.0
    %1591 = vmatpush.msra.mxu0 0.0
    %1592 = vmatpush.msra.mxu0 0.0
    %1593 = vmatpush.msra.mxu0 0.0
    %1594 = vmatpush.msra.mxu0 0.0
    %1595 = vmatpush.msra.mxu0 0.0
    %1596 = vmatpush.msra.mxu0 0.0
    %1597 = vmatpush.msra.mxu0 0.0
    %1598 = vmatpush.msra.mxu0 0.0
    %1599 = vmatpush.msra.mxu0 0.0
    %1600 = vmatpush.msra.mxu0 %v1021
    %1601 = vmatpush.msra.mxu0 %v1020
    %1602 = vmatpush.msra.mxu0 %v1019
    %1603 = vmatpush.msra.mxu0 %v1018
    %1604 = vmatmul.f32.gmra.mxu0 %v1586
    %v1605 = vpop.f32.mrf.mxu0
    %v1606 = vadd.f32 0.0, %v1605
    %1607 = vdwg.mxu0
    %v1608 = vadd.f32 %v1584, %v1606
    %v1609 = vxor.u32 %v1608, 2147483648
    %v1610 = vmul.f32 %v1609, 1.442695
    %v1611 = vpow.pop %v1610
    %v1612 = vadd.f32 %v1611, 1.0
    %v1613 = vrcp.pop %v1612
    %v1614 = vmul.f32 %v1612, %v1613
    %v1615 = vsub.f32 1.0, %v1614
    %v1616 = vmul.f32 %v1613, %v1615
    %v1617 = vadd.f32 %v1613, %v1616
    %vm1618 = vweird.f32 %v1612
    %vm1619 = vweird.f32 %v1613
    %vm1620 = vmor %vm1618, %vm1619
    %v1621 = vsel %vm1620, %v1613, %v1617
    %v1622 = vand.u32 2147483647, %v1612
    %vm1623 = vcmp.eq.f32.partialorder %v1622, 8.507059e+37
    %v1624 = vand.u32 %v1612, 2147483648
    %v1625 = vor.u32 1.1754944e-38, %v1624
    %v1626 = vsel %vm1623, %v1625, %v1621
    %v1627 = vmul.f32 1.0, %v1626
    %v1628 = vadd.f32 %v1606, %v1101
    %1630 = vrot.lane.b32.xlu0 %v1628, 64
    %v1631 = vpop.permute.xlu0 %1630
    %v1633 = vmul.f32 %v1627, %v1631
    %1635 = vrot.lane.b32.xlu0 %v1633, 64
    %v1636 = vpop.permute.xlu0 %1635
    %v1638 = vadd.f32 %v1584, %v1636
    %v1639 = vtanh.pop %v1638
    %v1640 = vsub.f32 1.0, %v1627
    %1642 = vrot.lane.b32.xlu0 %v1639, 96
    %v1643 = vpop.permute.xlu0 %1642
    %v1645 = vmul.f32 %v1640, %v1643
    %v1646 = vmul.f32 %v1627, %v1560
    %v1647 = vadd.f32 %v1645, %v1646
    %1649 = vrot.lane.b32.xlu0 %v1647, 96
    %v1650 = vpop.permute.xlu0 %1649
    %1652 = vst.msk [vmem:[#allocation2 + $0x30] sm:$0xff] %vm487, %v1650
    %v1653 = vsel %vm487, %v1014, 0
    %1655 = vmatpush.msra.mxu0 0.0
    %1656 = vmatpush.msra.mxu0 0.0
    %1657 = vmatpush.msra.mxu0 0.0
    %1658 = vmatpush.msra.mxu0 0.0
    %1659 = vmatpush.msra.mxu0 0.0
    %1660 = vmatpush.msra.mxu0 0.0
    %1661 = vmatpush.msra.mxu0 0.0
    %1662 = vmatpush.msra.mxu0 0.0
    %1663 = vmatpush.msra.mxu0 0.0
    %1664 = vmatpush.msra.mxu0 0.0
    %1665 = vmatpush.msra.mxu0 0.0
    %1666 = vmatpush.msra.mxu0 0.0
    %1667 = vmatpush.msra.mxu0 %v1029
    %1668 = vmatpush.msra.mxu0 %v1028
    %1669 = vmatpush.msra.mxu0 %v1027
    %1670 = vmatpush.msra.mxu0 %v1026
    %1671 = vmatmul.f32.gmra.mxu0 %v1653
    %v1672 = vpop.f32.mrf.mxu0
    %v1673 = vadd.f32 %v1033, %v1672
    %1674 = vdwg.mxu0
    %v1675 = vsel %vm487, %v1650, 0
    %1677 = vmatpush.msra.mxu0 0.0
    %1678 = vmatpush.msra.mxu0 0.0
    %1679 = vmatpush.msra.mxu0 0.0
    %1680 = vmatpush.msra.mxu0 0.0
    %1681 = vmatpush.msra.mxu0 0.0
    %1682 = vmatpush.msra.mxu0 0.0
    %1683 = vmatpush.msra.mxu0 0.0
    %1684 = vmatpush.msra.mxu0 0.0
    %1685 = vmatpush.msra.mxu0 0.0
    %1686 = vmatpush.msra.mxu0 0.0
    %1687 = vmatpush.msra.mxu0 0.0
    %1688 = vmatpush.msra.mxu0 0.0
    %1689 = vmatpush.msra.mxu0 %v1021
    %1690 = vmatpush.msra.mxu0 %v1020
    %1691 = vmatpush.msra.mxu0 %v1019
    %1692 = vmatpush.msra.mxu0 %v1018
    %1693 = vmatmul.f32.gmra.mxu0 %v1675
    %v1694 = vpop.f32.mrf.mxu0
    %v1695 = vadd.f32 0.0, %v1694
    %1696 = vdwg.mxu0
    %v1697 = vadd.f32 %v1673, %v1695
    %v1698 = vxor.u32 %v1697, 2147483648
    %v1699 = vmul.f32 %v1698, 1.442695
    %v1700 = vpow.pop %v1699
    %v1701 = vadd.f32 %v1700, 1.0
    %v1702 = vrcp.pop %v1701
    %v1703 = vmul.f32 %v1701, %v1702
    %v1704 = vsub.f32 1.0, %v1703
    %v1705 = vmul.f32 %v1702, %v1704
    %v1706 = vadd.f32 %v1702, %v1705
    %vm1707 = vweird.f32 %v1701
    %vm1708 = vweird.f32 %v1702
    %vm1709 = vmor %vm1707, %vm1708
    %v1710 = vsel %vm1709, %v1702, %v1706
    %v1711 = vand.u32 2147483647, %v1701
    %vm1712 = vcmp.eq.f32.partialorder %v1711, 8.507059e+37
    %v1713 = vand.u32 %v1701, 2147483648
    %v1714 = vor.u32 1.1754944e-38, %v1713
    %v1715 = vsel %vm1712, %v1714, %v1710
    %v1716 = vmul.f32 1.0, %v1715
    %v1717 = vadd.f32 %v1695, %v1101
    %1719 = vrot.lane.b32.xlu0 %v1717, 64
    %v1720 = vpop.permute.xlu0 %1719
    %v1722 = vmul.f32 %v1716, %v1720
    %1724 = vrot.lane.b32.xlu0 %v1722, 64
    %v1725 = vpop.permute.xlu0 %1724
    %v1727 = vadd.f32 %v1673, %v1725
    %v1728 = vtanh.pop %v1727
    %v1729 = vsub.f32 1.0, %v1716
    %1731 = vrot.lane.b32.xlu0 %v1728, 96
    %v1732 = vpop.permute.xlu0 %1731
    %v1734 = vmul.f32 %v1729, %v1732
    %v1735 = vmul.f32 %v1716, %v1647
    %v1736 = vadd.f32 %v1734, %v1735
    %1738 = vrot.lane.b32.xlu0 %v1736, 96
    %v1739 = vpop.permute.xlu0 %1738
    %1741 = vst.msk [vmem:[#allocation2 + $0x38] sm:$0xff] %vm487, %v1739
    %s1742 = scalar_lea.vmem %s10, 8
    %1743 = vst.msk [vmem:[%s1742] sm:$0xff] %vm487, %v1739
    %v1744 = vld [vmem:[#allocation2] sm:$0xff]
    %v1745 = vld [vmem:[#allocation2 + $0x8] sm:$0xff]
    %v1746 = vld [vmem:[#allocation2 + $0x10] sm:$0xff]
    %v1747 = vld [vmem:[#allocation2 + $0x18] sm:$0xff]
    %v1748 = vld [vmem:[#allocation2 + $0x20] sm:$0xff]
    %v1749 = vld [vmem:[#allocation2 + $0x28] sm:$0xff]
    %v1750 = vld [vmem:[#allocation2 + $0x30] sm:$0xff]
    %v1751 = vld [vmem:[#allocation2 + $0x38] sm:$0xff]
    %v1752 = vld [vmem:[%s7] sm:$0xff]
    %v1753 = vld [vmem:[%s7 + $0x8] sm:$0xff]
    %v1754 = vld [vmem:[%s7 + $0x10] sm:$0xff]
    %v1755 = vld [vmem:[%s7 + $0x18] sm:$0xff]
    %v1756 = vld [vmem:[#allocation5] sm:$0x1]
    %v1758 = vperm.slane %v1756, 0
    %v1761 = vsel %vm487, %v1744, 0
    %v1764 = vsel %vm487, %v1745, 0
    %v1767 = vsel %vm487, %v1746, 0
    %v1770 = vsel %vm487, %v1747, 0
    %v1773 = vsel %vm487, %v1748, 0
    %v1776 = vsel %vm487, %v1749, 0
    %v1779 = vsel %vm487, %v1750, 0
    %v1782 = vsel %vm487, %v1751, 0
    %1784 = vmatpush.msra.mxu0 0.0
    %1785 = vmatpush.msra.mxu0 0.0
    %1786 = vmatpush.msra.mxu0 0.0
    %1787 = vmatpush.msra.mxu0 0.0
    %1788 = vmatpush.msra.mxu0 0.0
    %1789 = vmatpush.msra.mxu0 0.0
    %1790 = vmatpush.msra.mxu0 0.0
    %1791 = vmatpush.msra.mxu0 0.0
    %1792 = vmatpush.msra.mxu0 0.0
    %1793 = vmatpush.msra.mxu0 0.0
    %1794 = vmatpush.msra.mxu0 0.0
    %1795 = vmatpush.msra.mxu0 0.0
    %v1796 = vand.u32 %v1755, 4294901760
    %1797 = vmatpush.msra.mxu0 %v1796
    %v1798 = vand.u32 %v1754, 4294901760
    %1799 = vmatpush.msra.mxu0 %v1798
    %v1800 = vand.u32 %v1753, 4294901760
    %1801 = vmatpush.msra.mxu0 %v1800
    %v1802 = vand.u32 %v1752, 4294901760
    %1803 = vmatpush.msra.mxu0 %v1802
    %v1804 = vand.u32 %v1761, 4294901760
    %v1805 = vsub.f32 %v1761, %v1804
    %v1806 = vand.u32 %v1805, 4294901760
    %v1807 = vsub.f32 %v1805, %v1806
    %v1808 = vand.u32 %v1807, 4294901760
    %1809 = vmatmul.f32.gmra.mxu0 %v1808
    %v1810 = vpop.f32.mrf.mxu0
    %v1811 = vadd.f32 %v1758, %v1810
    %v1812 = vand.u32 %v1764, 4294901760
    %v1813 = vsub.f32 %v1764, %v1812
    %v1814 = vand.u32 %v1813, 4294901760
    %v1815 = vsub.f32 %v1813, %v1814
    %v1816 = vand.u32 %v1815, 4294901760
    %1817 = vmatmul.f32.gmra.mxu0 %v1816
    %v1818 = vpop.f32.mrf.mxu0
    %v1819 = vadd.f32 %v1758, %v1818
    %v1820 = vand.u32 %v1767, 4294901760
    %v1821 = vsub.f32 %v1767, %v1820
    %v1822 = vand.u32 %v1821, 4294901760
    %v1823 = vsub.f32 %v1821, %v1822
    %v1824 = vand.u32 %v1823, 4294901760
    %1825 = vmatmul.f32.gmra.mxu0 %v1824
    %v1826 = vpop.f32.mrf.mxu0
    %v1827 = vadd.f32 %v1758, %v1826
    %v1828 = vand.u32 %v1770, 4294901760
    %v1829 = vsub.f32 %v1770, %v1828
    %v1830 = vand.u32 %v1829, 4294901760
    %v1831 = vsub.f32 %v1829, %v1830
    %v1832 = vand.u32 %v1831, 4294901760
    %1833 = vmatmul.f32.gmra.mxu0 %v1832
    %v1834 = vpop.f32.mrf.mxu0
    %v1835 = vadd.f32 %v1758, %v1834
    %v1836 = vand.u32 %v1773, 4294901760
    %v1837 = vsub.f32 %v1773, %v1836
    %v1838 = vand.u32 %v1837, 4294901760
    %v1839 = vsub.f32 %v1837, %v1838
    %v1840 = vand.u32 %v1839, 4294901760
    %1841 = vmatmul.f32.gmra.mxu0 %v1840
    %v1842 = vpop.f32.mrf.mxu0
    %v1843 = vadd.f32 %v1758, %v1842
    %v1844 = vand.u32 %v1776, 4294901760
    %v1845 = vsub.f32 %v1776, %v1844
    %v1846 = vand.u32 %v1845, 4294901760
    %v1847 = vsub.f32 %v1845, %v1846
    %v1848 = vand.u32 %v1847, 4294901760
    %1849 = vmatmul.f32.gmra.mxu0 %v1848
    %v1850 = vpop.f32.mrf.mxu0
    %v1851 = vadd.f32 %v1758, %v1850
    %v1852 = vand.u32 %v1779, 4294901760
    %v1853 = vsub.f32 %v1779, %v1852
    %v1854 = vand.u32 %v1853, 4294901760
    %v1855 = vsub.f32 %v1853, %v1854
    %v1856 = vand.u32 %v1855, 4294901760
    %1857 = vmatmul.f32.gmra.mxu0 %v1856
    %v1858 = vpop.f32.mrf.mxu0
    %v1859 = vadd.f32 %v1758, %v1858
    %v1860 = vand.u32 %v1782, 4294901760
    %v1861 = vsub.f32 %v1782, %v1860
    %v1862 = vand.u32 %v1861, 4294901760
    %v1863 = vsub.f32 %v1861, %v1862
    %v1864 = vand.u32 %v1863, 4294901760
    %1865 = vmatmul.f32.gmra.mxu0 %v1864
    %v1866 = vpop.f32.mrf.mxu0
    %v1867 = vadd.f32 %v1758, %v1866
    %1868 = vdwg.mxu0
    %1869 = vmatpush.msra.mxu0 0.0
    %1870 = vmatpush.msra.mxu0 0.0
    %1871 = vmatpush.msra.mxu0 0.0
    %1872 = vmatpush.msra.mxu0 0.0
    %1873 = vmatpush.msra.mxu0 0.0
    %1874 = vmatpush.msra.mxu0 0.0
    %1875 = vmatpush.msra.mxu0 0.0
    %1876 = vmatpush.msra.mxu0 0.0
    %1877 = vmatpush.msra.mxu0 0.0
    %1878 = vmatpush.msra.mxu0 0.0
    %1879 = vmatpush.msra.mxu0 0.0
    %1880 = vmatpush.msra.mxu0 0.0
    %v1881 = vand.u32 %v1755, 4294901760
    %v1882 = vsub.f32 %v1755, %v1881
    %v1883 = vand.u32 %v1882, 4294901760
    %v1884 = vsub.f32 %v1882, %v1883
    %v1885 = vand.u32 %v1884, 4294901760
    %1886 = vmatpush.msra.mxu0 %v1885
    %v1887 = vand.u32 %v1754, 4294901760
    %v1888 = vsub.f32 %v1754, %v1887
    %v1889 = vand.u32 %v1888, 4294901760
    %v1890 = vsub.f32 %v1888, %v1889
    %v1891 = vand.u32 %v1890, 4294901760
    %1892 = vmatpush.msra.mxu0 %v1891
    %v1893 = vand.u32 %v1753, 4294901760
    %v1894 = vsub.f32 %v1753, %v1893
    %v1895 = vand.u32 %v1894, 4294901760
    %v1896 = vsub.f32 %v1894, %v1895
    %v1897 = vand.u32 %v1896, 4294901760
    %1898 = vmatpush.msra.mxu0 %v1897
    %v1899 = vand.u32 %v1752, 4294901760
    %v1900 = vsub.f32 %v1752, %v1899
    %v1901 = vand.u32 %v1900, 4294901760
    %v1902 = vsub.f32 %v1900, %v1901
    %v1903 = vand.u32 %v1902, 4294901760
    %1904 = vmatpush.msra.mxu0 %v1903
    %v1905 = vand.u32 %v1761, 4294901760
    %1906 = vmatmul.f32.gmra.mxu0 %v1905
    %v1907 = vpop.f32.mrf.mxu0
    %v1908 = vadd.f32 %v1811, %v1907
    %v1909 = vand.u32 %v1764, 4294901760
    %1910 = vmatmul.f32.gmra.mxu0 %v1909
    %v1911 = vpop.f32.mrf.mxu0
    %v1912 = vadd.f32 %v1819, %v1911
    %v1913 = vand.u32 %v1767, 4294901760
    %1914 = vmatmul.f32.gmra.mxu0 %v1913
    %v1915 = vpop.f32.mrf.mxu0
    %v1916 = vadd.f32 %v1827, %v1915
    %v1917 = vand.u32 %v1770, 4294901760
    %1918 = vmatmul.f32.gmra.mxu0 %v1917
    %v1919 = vpop.f32.mrf.mxu0
    %v1920 = vadd.f32 %v1835, %v1919
    %v1921 = vand.u32 %v1773, 4294901760
    %1922 = vmatmul.f32.gmra.mxu0 %v1921
    %v1923 = vpop.f32.mrf.mxu0
    %v1924 = vadd.f32 %v1843, %v1923
    %v1925 = vand.u32 %v1776, 4294901760
    %1926 = vmatmul.f32.gmra.mxu0 %v1925
    %v1927 = vpop.f32.mrf.mxu0
    %v1928 = vadd.f32 %v1851, %v1927
    %v1929 = vand.u32 %v1779, 4294901760
    %1930 = vmatmul.f32.gmra.mxu0 %v1929
    %v1931 = vpop.f32.mrf.mxu0
    %v1932 = vadd.f32 %v1859, %v1931
    %v1933 = vand.u32 %v1782, 4294901760
    %1934 = vmatmul.f32.gmra.mxu0 %v1933
    %v1935 = vpop.f32.mrf.mxu0
    %v1936 = vadd.f32 %v1867, %v1935
    %1937 = vdwg.mxu0
    %1938 = vmatpush.msra.mxu0 0.0
    %1939 = vmatpush.msra.mxu0 0.0
    %1940 = vmatpush.msra.mxu0 0.0
    %1941 = vmatpush.msra.mxu0 0.0
    %1942 = vmatpush.msra.mxu0 0.0
    %1943 = vmatpush.msra.mxu0 0.0
    %1944 = vmatpush.msra.mxu0 0.0
    %1945 = vmatpush.msra.mxu0 0.0
    %1946 = vmatpush.msra.mxu0 0.0
    %1947 = vmatpush.msra.mxu0 0.0
    %1948 = vmatpush.msra.mxu0 0.0
    %1949 = vmatpush.msra.mxu0 0.0
    %v1950 = vand.u32 %v1755, 4294901760
    %v1951 = vsub.f32 %v1755, %v1950
    %1952 = vmatpush.msra.mxu0 %v1951
    %v1953 = vand.u32 %v1754, 4294901760
    %v1954 = vsub.f32 %v1754, %v1953
    %1955 = vmatpush.msra.mxu0 %v1954
    %v1956 = vand.u32 %v1753, 4294901760
    %v1957 = vsub.f32 %v1753, %v1956
    %1958 = vmatpush.msra.mxu0 %v1957
    %v1959 = vand.u32 %v1752, 4294901760
    %v1960 = vsub.f32 %v1752, %v1959
    %1961 = vmatpush.msra.mxu0 %v1960
    %v1962 = vand.u32 %v1761, 4294901760
    %v1963 = vsub.f32 %v1761, %v1962
    %1964 = vmatmul.f32.gmra.mxu0 %v1963
    %v1965 = vpop.f32.mrf.mxu0
    %v1966 = vadd.f32 %v1908, %v1965
    %v1967 = vand.u32 %v1764, 4294901760
    %v1968 = vsub.f32 %v1764, %v1967
    %1969 = vmatmul.f32.gmra.mxu0 %v1968
    %v1970 = vpop.f32.mrf.mxu0
    %v1971 = vadd.f32 %v1912, %v1970
    %v1972 = vand.u32 %v1767, 4294901760
    %v1973 = vsub.f32 %v1767, %v1972
    %1974 = vmatmul.f32.gmra.mxu0 %v1973
    %v1975 = vpop.f32.mrf.mxu0
    %v1976 = vadd.f32 %v1916, %v1975
    %v1977 = vand.u32 %v1770, 4294901760
    %v1978 = vsub.f32 %v1770, %v1977
    %1979 = vmatmul.f32.gmra.mxu0 %v1978
    %v1980 = vpop.f32.mrf.mxu0
    %v1981 = vadd.f32 %v1920, %v1980
    %v1982 = vand.u32 %v1773, 4294901760
    %v1983 = vsub.f32 %v1773, %v1982
    %1984 = vmatmul.f32.gmra.mxu0 %v1983
    %v1985 = vpop.f32.mrf.mxu0
    %v1986 = vadd.f32 %v1924, %v1985
    %v1987 = vand.u32 %v1776, 4294901760
    %v1988 = vsub.f32 %v1776, %v1987
    %1989 = vmatmul.f32.gmra.mxu0 %v1988
    %v1990 = vpop.f32.mrf.mxu0
    %v1991 = vadd.f32 %v1928, %v1990
    %v1992 = vand.u32 %v1779, 4294901760
    %v1993 = vsub.f32 %v1779, %v1992
    %1994 = vmatmul.f32.gmra.mxu0 %v1993
    %v1995 = vpop.f32.mrf.mxu0
    %v1996 = vadd.f32 %v1932, %v1995
    %v1997 = vand.u32 %v1782, 4294901760
    %v1998 = vsub.f32 %v1782, %v1997
    %1999 = vmatmul.f32.gmra.mxu0 %v1998
    %v2000 = vpop.f32.mrf.mxu0
    %v2001 = vadd.f32 %v1936, %v2000
    %2002 = vdwg.mxu0
    %2003 = vmatpush.msra.mxu0 0.0
    %2004 = vmatpush.msra.mxu0 0.0
    %2005 = vmatpush.msra.mxu0 0.0
    %2006 = vmatpush.msra.mxu0 0.0
    %2007 = vmatpush.msra.mxu0 0.0
    %2008 = vmatpush.msra.mxu0 0.0
    %2009 = vmatpush.msra.mxu0 0.0
    %2010 = vmatpush.msra.mxu0 0.0
    %2011 = vmatpush.msra.mxu0 0.0
    %2012 = vmatpush.msra.mxu0 0.0
    %2013 = vmatpush.msra.mxu0 0.0
    %2014 = vmatpush.msra.mxu0 0.0
    %v2015 = vand.u32 %v1755, 4294901760
    %2016 = vmatpush.msra.mxu0 %v2015
    %v2017 = vand.u32 %v1754, 4294901760
    %2018 = vmatpush.msra.mxu0 %v2017
    %v2019 = vand.u32 %v1753, 4294901760
    %2020 = vmatpush.msra.mxu0 %v2019
    %v2021 = vand.u32 %v1752, 4294901760
    %2022 = vmatpush.msra.mxu0 %v2021
    %v2023 = vand.u32 %v1761, 4294901760
    %v2024 = vsub.f32 %v1761, %v2023
    %v2025 = vand.u32 %v2024, 4294901760
    %2026 = vmatmul.f32.gmra.mxu0 %v2025
    %v2027 = vpop.f32.mrf.mxu0
    %v2028 = vadd.f32 %v1966, %v2027
    %v2029 = vand.u32 %v1764, 4294901760
    %v2030 = vsub.f32 %v1764, %v2029
    %v2031 = vand.u32 %v2030, 4294901760
    %2032 = vmatmul.f32.gmra.mxu0 %v2031
    %v2033 = vpop.f32.mrf.mxu0
    %v2034 = vadd.f32 %v1971, %v2033
    %v2035 = vand.u32 %v1767, 4294901760
    %v2036 = vsub.f32 %v1767, %v2035
    %v2037 = vand.u32 %v2036, 4294901760
    %2038 = vmatmul.f32.gmra.mxu0 %v2037
    %v2039 = vpop.f32.mrf.mxu0
    %v2040 = vadd.f32 %v1976, %v2039
    %v2041 = vand.u32 %v1770, 4294901760
    %v2042 = vsub.f32 %v1770, %v2041
    %v2043 = vand.u32 %v2042, 4294901760
    %2044 = vmatmul.f32.gmra.mxu0 %v2043
    %v2045 = vpop.f32.mrf.mxu0
    %v2046 = vadd.f32 %v1981, %v2045
    %v2047 = vand.u32 %v1773, 4294901760
    %v2048 = vsub.f32 %v1773, %v2047
    %v2049 = vand.u32 %v2048, 4294901760
    %2050 = vmatmul.f32.gmra.mxu0 %v2049
    %v2051 = vpop.f32.mrf.mxu0
    %v2052 = vadd.f32 %v1986, %v2051
    %v2053 = vand.u32 %v1776, 4294901760
    %v2054 = vsub.f32 %v1776, %v2053
    %v2055 = vand.u32 %v2054, 4294901760
    %2056 = vmatmul.f32.gmra.mxu0 %v2055
    %v2057 = vpop.f32.mrf.mxu0
    %v2058 = vadd.f32 %v1991, %v2057
    %v2059 = vand.u32 %v1779, 4294901760
    %v2060 = vsub.f32 %v1779, %v2059
    %v2061 = vand.u32 %v2060, 4294901760
    %2062 = vmatmul.f32.gmra.mxu0 %v2061
    %v2063 = vpop.f32.mrf.mxu0
    %v2064 = vadd.f32 %v1996, %v2063
    %v2065 = vand.u32 %v1782, 4294901760
    %v2066 = vsub.f32 %v1782, %v2065
    %v2067 = vand.u32 %v2066, 4294901760
    %2068 = vmatmul.f32.gmra.mxu0 %v2067
    %v2069 = vpop.f32.mrf.mxu0
    %v2070 = vadd.f32 %v2001, %v2069
    %2071 = vdwg.mxu0
    %2072 = vmatpush.msra.mxu0 0.0
    %2073 = vmatpush.msra.mxu0 0.0
    %2074 = vmatpush.msra.mxu0 0.0
    %2075 = vmatpush.msra.mxu0 0.0
    %2076 = vmatpush.msra.mxu0 0.0
    %2077 = vmatpush.msra.mxu0 0.0
    %2078 = vmatpush.msra.mxu0 0.0
    %2079 = vmatpush.msra.mxu0 0.0
    %2080 = vmatpush.msra.mxu0 0.0
    %2081 = vmatpush.msra.mxu0 0.0
    %2082 = vmatpush.msra.mxu0 0.0
    %2083 = vmatpush.msra.mxu0 0.0
    %v2084 = vand.u32 %v1755, 4294901760
    %v2085 = vsub.f32 %v1755, %v2084
    %v2086 = vand.u32 %v2085, 4294901760
    %2087 = vmatpush.msra.mxu0 %v2086
    %v2088 = vand.u32 %v1754, 4294901760
    %v2089 = vsub.f32 %v1754, %v2088
    %v2090 = vand.u32 %v2089, 4294901760
    %2091 = vmatpush.msra.mxu0 %v2090
    %v2092 = vand.u32 %v1753, 4294901760
    %v2093 = vsub.f32 %v1753, %v2092
    %v2094 = vand.u32 %v2093, 4294901760
    %2095 = vmatpush.msra.mxu0 %v2094
    %v2096 = vand.u32 %v1752, 4294901760
    %v2097 = vsub.f32 %v1752, %v2096
    %v2098 = vand.u32 %v2097, 4294901760
    %2099 = vmatpush.msra.mxu0 %v2098
    %v2100 = vand.u32 %v1761, 4294901760
    %2101 = vmatmul.f32.gmra.mxu0 %v2100
    %v2102 = vpop.f32.mrf.mxu0
    %v2103 = vadd.f32 %v2028, %v2102
    %v2104 = vand.u32 %v1764, 4294901760
    %2105 = vmatmul.f32.gmra.mxu0 %v2104
    %v2106 = vpop.f32.mrf.mxu0
    %v2107 = vadd.f32 %v2034, %v2106
    %v2108 = vand.u32 %v1767, 4294901760
    %2109 = vmatmul.f32.gmra.mxu0 %v2108
    %v2110 = vpop.f32.mrf.mxu0
    %v2111 = vadd.f32 %v2040, %v2110
    %v2112 = vand.u32 %v1770, 4294901760
    %2113 = vmatmul.f32.gmra.mxu0 %v2112
    %v2114 = vpop.f32.mrf.mxu0
    %v2115 = vadd.f32 %v2046, %v2114
    %v2116 = vand.u32 %v1773, 4294901760
    %2117 = vmatmul.f32.gmra.mxu0 %v2116
    %v2118 = vpop.f32.mrf.mxu0
    %v2119 = vadd.f32 %v2052, %v2118
    %v2120 = vand.u32 %v1776, 4294901760
    %2121 = vmatmul.f32.gmra.mxu0 %v2120
    %v2122 = vpop.f32.mrf.mxu0
    %v2123 = vadd.f32 %v2058, %v2122
    %v2124 = vand.u32 %v1779, 4294901760
    %2125 = vmatmul.f32.gmra.mxu0 %v2124
    %v2126 = vpop.f32.mrf.mxu0
    %v2127 = vadd.f32 %v2064, %v2126
    %v2128 = vand.u32 %v1782, 4294901760
    %2129 = vmatmul.f32.gmra.mxu0 %v2128
    %v2130 = vpop.f32.mrf.mxu0
    %v2131 = vadd.f32 %v2070, %v2130
    %2132 = vdwg.mxu0
    %2133 = vmatpush.msra.mxu0 0.0
    %2134 = vmatpush.msra.mxu0 0.0
    %2135 = vmatpush.msra.mxu0 0.0
    %2136 = vmatpush.msra.mxu0 0.0
    %2137 = vmatpush.msra.mxu0 0.0
    %2138 = vmatpush.msra.mxu0 0.0
    %2139 = vmatpush.msra.mxu0 0.0
    %2140 = vmatpush.msra.mxu0 0.0
    %2141 = vmatpush.msra.mxu0 0.0
    %2142 = vmatpush.msra.mxu0 0.0
    %2143 = vmatpush.msra.mxu0 0.0
    %2144 = vmatpush.msra.mxu0 0.0
    %v2145 = vand.u32 %v1755, 4294901760
    %2146 = vmatpush.msra.mxu0 %v2145
    %v2147 = vand.u32 %v1754, 4294901760
    %2148 = vmatpush.msra.mxu0 %v2147
    %v2149 = vand.u32 %v1753, 4294901760
    %2150 = vmatpush.msra.mxu0 %v2149
    %v2151 = vand.u32 %v1752, 4294901760
    %2152 = vmatpush.msra.mxu0 %v2151
    %v2153 = vand.u32 %v1761, 4294901760
    %2154 = vmatmul.f32.gmra.mxu0 %v2153
    %v2155 = vpop.f32.mrf.mxu0
    %v2156 = vadd.f32 %v2103, %v2155
    %v2157 = vand.u32 %v1764, 4294901760
    %2158 = vmatmul.f32.gmra.mxu0 %v2157
    %v2159 = vpop.f32.mrf.mxu0
    %v2160 = vadd.f32 %v2107, %v2159
    %v2161 = vand.u32 %v1767, 4294901760
    %2162 = vmatmul.f32.gmra.mxu0 %v2161
    %v2163 = vpop.f32.mrf.mxu0
    %v2164 = vadd.f32 %v2111, %v2163
    %v2165 = vand.u32 %v1770, 4294901760
    %2166 = vmatmul.f32.gmra.mxu0 %v2165
    %v2167 = vpop.f32.mrf.mxu0
    %v2168 = vadd.f32 %v2115, %v2167
    %v2169 = vand.u32 %v1773, 4294901760
    %2170 = vmatmul.f32.gmra.mxu0 %v2169
    %v2171 = vpop.f32.mrf.mxu0
    %v2172 = vadd.f32 %v2119, %v2171
    %v2173 = vand.u32 %v1776, 4294901760
    %2174 = vmatmul.f32.gmra.mxu0 %v2173
    %v2175 = vpop.f32.mrf.mxu0
    %v2176 = vadd.f32 %v2123, %v2175
    %v2177 = vand.u32 %v1779, 4294901760
    %2178 = vmatmul.f32.gmra.mxu0 %v2177
    %v2179 = vpop.f32.mrf.mxu0
    %v2180 = vadd.f32 %v2127, %v2179
    %v2181 = vand.u32 %v1782, 4294901760
    %2182 = vmatmul.f32.gmra.mxu0 %v2181
    %v2183 = vpop.f32.mrf.mxu0
    %v2184 = vadd.f32 %v2131, %v2183
    %2185 = vdwg.mxu0
    %2186 = vst.msk [vmem:[%s9] sm:$0xff] %vm78, %v2156
    %2187 = vst.msk [vmem:[%s9 + $0x8] sm:$0xff] %vm78, %v2160
    %2188 = vst.msk [vmem:[%s9 + $0x10] sm:$0xff] %vm78, %v2164
    %2189 = vst.msk [vmem:[%s9 + $0x18] sm:$0xff] %vm78, %v2168
    %2190 = vst.msk [vmem:[%s9 + $0x20] sm:$0xff] %vm78, %v2172
    %2191 = vst.msk [vmem:[%s9 + $0x28] sm:$0xff] %vm78, %v2176
    %2192 = vst.msk [vmem:[%s9 + $0x30] sm:$0xff] %vm78, %v2180
    %2193 = vst.msk [vmem:[%s9 + $0x38] sm:$0xff] %vm78, %v2184
    // Predicated region
    $region46: #{_lambda_.1} parent=1 // pred_check
      _
    $region47: #{_lambda_.1} parent=1 // pred_check_branch
      %2195 = sbr.rel (0) target = $region49
    $region48: #{_lambda_.1} parent=1 // pred_region
      _
    $region49: #{_lambda_.1} parent=1 // pred_fallthru
      _
    // Predicated region
    $region50: #{_lambda_.1} parent=1 // pred_check
      _
    $region51: #{_lambda_.1} parent=1 // pred_check_branch
      %2197 = sbr.rel (0) target = $region53
    $region52: #{_lambda_.1} parent=1 // pred_region
      _
    $region53: #{_lambda_.1} parent=1 // pred_fallthru
      _
    // Predicated region
    $region54: #{_lambda_.1} parent=1 // pred_check
      _
    $region55: #{_lambda_.1} parent=1 // pred_check_branch
      %2199 = sbr.rel (0) target = $region57
    $region56: #{_lambda_.1} parent=1 // pred_region
      _
    $region57: #{_lambda_.1} parent=1 // pred_fallthru
      _
    // Predicated region
    $region58: #{_lambda_.1} parent=1 // pred_check
      _
    $region59: #{_lambda_.1} parent=1 // pred_check_branch
      %2201 = sbr.rel (0) target = $region61
    $region60: #{_lambda_.1} parent=1 // pred_region
      _
    $region61: #{_lambda_.1} parent=1 // pred_fallthru
      _
    %2202 = vsyncpa [#allocation4], 1
    %2203 = vsyncpa [#allocation6], 1

</llo_original>
